<compile_context>
chip_gen: v6e
topology: v6e:2x2x1
jax: 0.10.0
libtpu: 0.0.40
codegen_flags: <defaults>
</compile_context>

<pallas_src>
import math

import jax
import jax.numpy as jnp
import numpy as np
from jax.experimental import pallas as pl
from jax.experimental.pallas import tpu as pltpu


# Rows of the packed (16, D) vector slab (biases + LayerNorm params).
SA_BQ, SA_BK, SA_BV, SA_BO = 0, 1, 2, 3
CA_BQ, CA_BK, CA_BV, CA_BO = 4, 5, 6, 7
B2_ROW = 8
N1W, N1B, N2W, N2B, N3W, N3B = 9, 10, 11, 12, 13, 14
# Indices into the (6, D, D) stacked weight slab.
I_SA_WV, I_SA_WO, I_CA_WQ, I_CA_WK, I_CA_WV, I_CA_WO = range(6)


# ---------------------------------------------------------------------------
# Pallas kernel (one batch per grid step)
# ---------------------------------------------------------------------------
def _make_decoder_layer_kernel(T, D, nhead, pack, eps=1e-5):
    head_dim = D // nhead
    scale = 1.0 / math.sqrt(head_dim)
    HT = nhead * T
    BF = jnp.bfloat16
    if pack:
        f = 128 // D          # lane-packing factor
        prows = T // f        # rows of the packed output slab

    def mm(a, w):
        # bf16 operands, f32 accumulation on the MXU.
        return jnp.dot(a.astype(BF), w.astype(BF), preferred_element_type=jnp.float32)

    def kernel(tgt_ref, mem_ref, qpos_ref, pos_ref, hmask_ref,
               sa_wqk_ref, wdd_ref, w1_ref, w2_ref, b1_ref, vec_ref, out_ref):
        vecs = vec_ref[...]                      # (16, D) f32
        hmask = hmask_ref[...]                   # (H*T, D) 0/1 f32 (hoisted to wrapper)
        qmask = hmask * scale                    # fold 1/sqrt(head_dim) into the Q mask

        def vec(i):
            return vecs[i:i + 1, :]              # (1, D), broadcasts over rows

        def layer_norm(x, wi, bi):
            mu = jnp.mean(x, axis=-1, keepdims=True)
            xc = x - mu
            var = jnp.mean(xc * xc, axis=-1, keepdims=True)
            return xc * jax.lax.rsqrt(var + eps) * vec(wi) + vec(bi)

        def attention(q, k, v, w_o, bo):
            # q: (T, D); k, v: (kv, D).  All heads at once via masked row stacking:
            # row block h of q_st owns lanes [h*hd, (h+1)*hd) -> 2 MXU pushes total.
            k_bf = k.astype(BF)
            v_bf = v.astype(BF)
            # broadcast + leading-dim reshape (free: T == f32 sublane tile), no concats.
            q_st = (jnp.broadcast_to(q[None, :, :], (nhead, T, D))
                    .reshape(HT, D) * qmask).astype(BF)                    # (H*T, D)
            # Scores for every head at once (k used "transposed").
            s = jax.lax.dot_general(q_st, k_bf, (((1,), (1,)), ((), ())),
                                    preferred_element_type=jnp.float32)   # (H*T, kv)
            s = s - jnp.max(s, axis=-1, keepdims=True)
            p = jnp.exp(s)
            p = p * pl.reciprocal(jnp.sum(p, axis=-1, keepdims=True), approx=True)
            # PV for every head; keep each head's own lane block and fold the head axis.
            o_st = jnp.dot(p.astype(BF), v_bf,
                           preferred_element_type=jnp.float32) * hmask    # (H*T, D)
            o = jnp.sum(o_st.reshape(nhead, T, D), axis=0)                # (T, D)
            return mm(o, w_o) + bo                                        # out_proj

        tgt = tgt_ref[0]                         # (T, D) f32
        mem = mem_ref[0]                         # (S, D) f32
        qpos = qpos_ref[0]
        pos = pos_ref[0]

        # --- self-attention: q = k = tgt + query_pos, value = tgt (post-LN) ----------
        qk = mm(tgt + qpos, sa_wqk_ref[...])     # fused [Q|K] projection (D -> 2D lanes)
        q_sa = qk[:, 0:D] + vec(SA_BQ)
        k_sa = qk[:, D:2 * D] + vec(SA_BK)
        v_sa = mm(tgt, wdd_ref[I_SA_WV]) + vec(SA_BV)
        sa = attention(q_sa, k_sa, v_sa, wdd_ref[I_SA_WO], vec(SA_BO))
        x1 = layer_norm(tgt + sa, N1W, N1B)      # dropout1 = identity (eval)

        # --- cross-attention: q = x1 + query_pos, k = memory + pos, v = memory -------
        q_ca = mm(x1 + qpos, wdd_ref[I_CA_WQ]) + vec(CA_BQ)
        k_ca = mm(mem + pos, wdd_ref[I_CA_WK]) + vec(CA_BK)
        v_ca = mm(mem, wdd_ref[I_CA_WV]) + vec(CA_BV)
        ca = attention(q_ca, k_ca, v_ca, wdd_ref[I_CA_WO], vec(CA_BO))
        x2 = layer_norm(x1 + ca, N2W, N2B)       # dropout2 = identity

        # --- feed-forward: linear1 -> relu -> linear2 ---------------------------------
        h = jnp.maximum(mm(x2, w1_ref[...]) + b1_ref[...], 0.0)
        ff = mm(h, w2_ref[...]) + vec(B2_ROW)
        x3 = layer_norm(x2 + ff, N3W, N3B)       # dropout3 = identity

        if pack:
            # Lane-dense output slab: packed[r, c*D:(c+1)*D] = x3[c*prows + r, :]
            # -> unmasked 128-lane stores.  The wrapper inverts this pure permutation.
            packed = jnp.concatenate(
                [x3[c * prows:(c + 1) * prows, :] for c in range(f)], axis=1)  # (prows,128)
            out_ref[0] = packed.astype(out_ref.dtype)
        else:
            out_ref[0] = x3.astype(out_ref.dtype)

    return kernel


# ---------------------------------------------------------------------------
# Wrapper (layout fold, weight packing to bf16, pallas_call)
# ---------------------------------------------------------------------------
def decoder_layer_forward(params, tgt, memory, pos=None, query_pos=None):
    """PyTorch layout: tgt (T,B,D), memory (S,B,D), pos (S,B,D), query_pos (T,B,D)."""
    T, B, D = tgt.shape
    S = memory.shape[0]
    H = params["nhead"]
    FF = params["w1"].shape[1]
    head_dim = D // H
    if query_pos is None:
        query_pos = jnp.zeros_like(tgt)
    if pos is None:
        pos = jnp.zeros_like(memory)

    # (L, B, D) -> (B, L, D): batch-major so each grid step DMAs one contiguous batch slab.
    # TODO(synk): at production sizes accept batch-major activations (or fuse this
    # transpose into the input DMA) to avoid one extra HBM round trip per input.
    tgt_b = jnp.transpose(tgt, (1, 0, 2))
    mem_b = jnp.transpose(memory, (1, 0, 2))
    qpos_b = jnp.transpose(query_pos, (1, 0, 2))
    pos_b = jnp.transpose(pos, (1, 0, 2))

    # Head-selection mask, hoisted out of the kernel: row block h owns lanes [h*hd,(h+1)*hd).
    col = np.arange(D)
    hmask = np.concatenate(
        [np.repeat(((col >= h * head_dim) & (col < (h + 1) * head_dim))
                   .astype(np.float32)[None, :], T, axis=0) for h in range(H)], axis=0)
    hmask = jnp.asarray(hmask)                                    # (H*T, D) f32

    # Lane-dense packed output geometry (only needed when D < 128).
    pack = (D < 128) and (128 % D == 0) and (T % (128 // D) == 0)
    if pack:
        f = 128 // D
        prows = T // f
        out_shape = jax.ShapeDtypeStruct((B, prows, 128), jnp.float32)
        out_spec = pl.BlockSpec((1, prows, 128), lambda b: (b, 0, 0))
    else:
        out_shape = jax.ShapeDtypeStruct((B, T, D), jnp.float32)
        out_spec = pl.BlockSpec((1, T, D), lambda b: (b, 0, 0))

    kernel = _make_decoder_layer_kernel(T, D, H, pack)

    bf = jnp.bfloat16
    args = (
        tgt_b, mem_b, qpos_b, pos_b, hmask,
        params["sa_wqk"].astype(bf),     # fused [Wq | Wk] for self-attention, (D, 2D)
        params["w_dd"].astype(bf),       # (6, D, D) stacked DxD weights
        params["w1"].astype(bf),         # (D, FF)
        params["w2"].astype(bf),         # (FF, D)
        params["b1"],                    # (1, FF) f32
        params["vecs"],                  # (16, D) f32: biases + LayerNorm params
    )

    in_specs = [
        pl.BlockSpec((1, T, D), lambda b: (b, 0, 0)),     # tgt (per-batch slab)
        pl.BlockSpec((1, S, D), lambda b: (b, 0, 0)),     # memory
        pl.BlockSpec((1, T, D), lambda b: (b, 0, 0)),     # query_pos
        pl.BlockSpec((1, S, D), lambda b: (b, 0, 0)),     # pos
        pl.BlockSpec((H * T, D), lambda b: (0, 0)),       # head mask (shared, resident)
        pl.BlockSpec((D, 2 * D), lambda b: (0, 0)),       # sa [Wq|Wk]
        pl.BlockSpec((6, D, D), lambda b: (0, 0, 0)),     # stacked DxD weights
        pl.BlockSpec((D, FF), lambda b: (0, 0)),          # w1
        pl.BlockSpec((FF, D), lambda b: (0, 0)),          # w2
        pl.BlockSpec((1, FF), lambda b: (0, 0)),          # b1
        pl.BlockSpec((16, D), lambda b: (0, 0)),          # biases / LN vectors
    ]

    # Advisory cost estimate so XLA can schedule neighbouring ops around the call.
    HT = H * T
    flops = (2 * B * T * D * (2 * D) + 2 * B * T * D * D          # SA proj (fused QK, V)
             + 2 * 2 * B * HT * T * D + 2 * B * T * D * D         # SA scores/PV, out proj
             + 2 * B * T * D * D + 2 * 2 * B * S * D * D          # CA Q, K, V proj
             + 2 * 2 * B * HT * S * D + 2 * B * T * D * D         # CA scores/PV, out proj
             + 2 * 2 * B * T * D * FF)                            # FFN
    transcendentals = B * HT * (T + S) + 2 * B * HT + 3 * B * T
    bytes_accessed = sum(int(a.size) * a.dtype.itemsize for a in args) + B * T * D * 4
    cost = pl.CostEstimate(flops=int(flops), transcendentals=int(transcendentals),
                           bytes_accessed=int(bytes_accessed))

    out = pl.pallas_call(
        kernel,
        out_shape=out_shape,
        grid=(B,),
        in_specs=in_specs,
        out_specs=out_spec,
        compiler_params=pltpu.CompilerParams(
            dimension_semantics=("parallel",),          # v7x: batches spread over 2 TCs
            vmem_limit_bytes=32 * 1024 * 1024),         # explicit, per review
        cost_estimate=cost,
    )(*args)

    if pack:
        # Invert the in-kernel lane packing (pure permutation, done in XLA).
        out = (out.reshape(B, prows, f, D)
               .transpose(0, 2, 1, 3)
               .reshape(B, T, D))
    return jnp.transpose(out, (1, 0, 2))                 # back to (T, B, D)


# ---------------------------------------------------------------------------
# Deterministic parameter init (fused / packed layout)
# ---------------------------------------------------------------------------
def init_params(key, d_model, nhead, dim_feedforward):
    D, FF = d_model, dim_feedforward
    keys = iter(jax.random.split(key, 20))

    def w(in_dim, out_dim):
        # stored pre-transposed (in, out) so kernels compute x @ W
        return jax.random.normal(next(keys), (in_dim, out_dim), jnp.float32) / math.sqrt(in_dim)

    def b(dim):
        return jax.random.normal(next(keys), (dim,), jnp.float32) * 0.02

    sa_wq, sa_wk, sa_wv, sa_wo = w(D, D), w(D, D), w(D, D), w(D, D)
    ca_wq, ca_wk, ca_wv, ca_wo = w(D, D), w(D, D), w(D, D), w(D, D)
    w1, w2 = w(D, FF), w(FF, D)

    sa_bq, sa_bk, sa_bv, sa_bo = b(D), b(D), b(D), b(D)
    ca_bq, ca_bk, ca_bv, ca_bo = b(D), b(D), b(D), b(D)
    b1, b2 = b(FF), b(D)

    vecs = jnp.zeros((16, D), jnp.float32)
    rows = {SA_BQ: sa_bq, SA_BK: sa_bk, SA_BV: sa_bv, SA_BO: sa_bo,
            CA_BQ: ca_bq, CA_BK: ca_bk, CA_BV: ca_bv, CA_BO: ca_bo,
            B2_ROW: b2,
            N1W: jnp.ones((D,), jnp.float32), N1B: jnp.zeros((D,), jnp.float32),
            N2W: jnp.ones((D,), jnp.float32), N2B: jnp.zeros((D,), jnp.float32),
            N3W: jnp.ones((D,), jnp.float32), N3B: jnp.zeros((D,), jnp.float32)}
    for i, v in rows.items():
        vecs = vecs.at[i].set(v)

    return {
        "nhead": nhead,
        "sa_wqk": jnp.concatenate([sa_wq, sa_wk], axis=1),                       # (D, 2D)
        "w_dd": jnp.stack([sa_wv, sa_wo, ca_wq, ca_wk, ca_wv, ca_wo], axis=0),   # (6, D, D)
        "w1": w1, "w2": w2,
        "b1": b1.reshape(1, FF),
        "vecs": vecs,
    }


# ---------------------------------------------------------------------------
# Pure-JAX reference (PyTorch (L,B,D) layout).  Matmul operands are cast to bf16
# with f32 accumulation exactly like the kernel, so only accumulation order and
# the approximate softmax reciprocal differ.
# ---------------------------------------------------------------------------
def reference_forward(params, tgt, memory, pos, query_pos):
    D = tgt.shape[-1]
    H = params["nhead"]
    hd = D // H
    scale = 1.0 / math.sqrt(hd)
    eps = 1e-5
    bf = jnp.bfloat16
    vecs = params["vecs"]

    def mm(a, w):
        return jnp.dot(a.astype(bf), w.astype(bf), preferred_element_type=jnp.float32)

    def ln(x, wi, bi):
        mu = x.mean(-1, keepdims=True)
        var = ((x - mu) ** 2).mean(-1, keepdims=True)
        return (x - mu) * jax.lax.rsqrt(var + eps) * vecs[wi] + vecs[bi]

    def mha(q_in, k_in, v_in, wq, bq, wk, bk, wv, bv, wo, bo):
        q = mm(q_in, wq) + vecs[bq]
        k = mm(k_in, wk) + vecs[bk]
        v = mm(v_in, wv) + vecs[bv]

        def split(x):                      # (L, B, D) -> (B, H, L, hd)
            L, Bb, _ = x.shape
            return x.reshape(L, Bb, H, hd).transpose(1, 2, 0, 3)

        qh, kh, vh = split(q), split(k), split(v)
        s = jnp.einsum("bhqd,bhkd->bhqk", (qh * scale).astype(bf), kh.astype(bf),
                       preferred_element_type=jnp.float32)
        p = jax.nn.softmax(s, axis=-1)
        o = jnp.einsum("bhqk,bhkd->bhqd", p.astype(bf), vh.astype(bf),
                       preferred_element_type=jnp.float32)
        o = o.transpose(2, 0, 1, 3).reshape(q_in.shape[0], q_in.shape[1], D)
        return mm(o, wo) + vecs[bo]

    sa_wq = params["sa_wqk"][:, :D]
    sa_wk = params["sa_wqk"][:, D:]
    sa_wv, sa_wo, ca_wq, ca_wk, ca_wv, ca_wo = [params["w_dd"][i] for i in range(6)]

    qk = tgt + query_pos
    x = ln(tgt + mha(qk, qk, tgt,
                     sa_wq, SA_BQ, sa_wk, SA_BK, sa_wv, SA_BV, sa_wo, SA_BO),
           N1W, N1B)
    x = ln(x + mha(x + query_pos, memory + pos, memory,
                   ca_wq, CA_BQ, ca_wk, CA_BK, ca_wv, CA_BV, ca_wo, CA_BO),
           N2W, N2B)
    h = jnp.maximum(mm(x, params["w1"]) + params["b1"][0], 0.0)
    x = ln(x + mm(h, params["w2"]) + vecs[B2_ROW], N3W, N3B)
    return x


if __name__ == "__main__":
    d_model, nhead, dim_feedforward = 32, 4, 64
    T, S, B = 8, 16, 2   # target seq len, memory seq len, batch

    root = jax.random.PRNGKey(0)
    k_par, k_tgt, k_mem, k_pos, k_qpos = jax.random.split(root, 5)

    params = init_params(k_par, d_model, nhead, dim_feedforward)
    tgt = jax.random.normal(k_tgt, (T, B, d_model), jnp.float32)
    memory = jax.random.normal(k_mem, (S, B, d_model), jnp.float32)
    pos = jax.random.normal(k_pos, (S, B, d_model), jnp.float32)
    query_pos = jax.random.normal(k_qpos, (T, B, d_model), jnp.float32)

    out = decoder_layer_forward(params, tgt, memory, pos=pos, query_pos=query_pos)
    out = jax.block_until_ready(out)

    ref = reference_forward(params, tgt, memory, pos, query_pos)
    # Tolerance budget: bf16 operand rounding boundary effects and the approximate
    # EUP reciprocal in the kernel softmax (both << 1e-2).
    np.testing.assert_allclose(np.asarray(out), np.asarray(ref), rtol=1e-2, atol=1e-2)

    print("KERNEL_OK")
</pallas_src>

<mosaic_0001>
module attributes {stable_mosaic.version = 11 : i64} {
  func.func @kernel(%arg0: i32, %arg1: memref<1x8x32xf32, #tpu.memory_space<vmem>>, %arg2: memref<1x16x32xf32, #tpu.memory_space<vmem>>, %arg3: memref<1x8x32xf32, #tpu.memory_space<vmem>>, %arg4: memref<1x16x32xf32, #tpu.memory_space<vmem>>, %arg5: memref<32x32xf32, #tpu.memory_space<vmem>>, %arg6: memref<32x64xbf16, #tpu.memory_space<vmem>>, %arg7: memref<6x32x32xbf16, #tpu.memory_space<vmem>>, %arg8: memref<32x64xbf16, #tpu.memory_space<vmem>>, %arg9: memref<64x32xbf16, #tpu.memory_space<vmem>>, %arg10: memref<1x64xf32, #tpu.memory_space<vmem>>, %arg11: memref<16x32xf32, #tpu.memory_space<vmem>>, %arg12: memref<1x2x128xf32, #tpu.memory_space<vmem>>) attributes {dimension_semantics = [#tpu.dimension_semantics<parallel>], iteration_bounds = array<i64: 2>, scalar_prefetch = 0 : i64, scratch_operands = 0 : i64, tpu.core_type = #tpu.core_type<tc>, window_params = [{transform_indices = @transform_0, window_bounds = array<i64: 1, 8, 32>}, {transform_indices = @transform_1, window_bounds = array<i64: 1, 16, 32>}, {transform_indices = @transform_2, window_bounds = array<i64: 1, 8, 32>}, {transform_indices = @transform_3, window_bounds = array<i64: 1, 16, 32>}, {pipeline_mode = #tpu.pipeline_mode<synchronous>, transform_indices = @transform_4, window_bounds = array<i64: 32, 32>}, {pipeline_mode = #tpu.pipeline_mode<synchronous>, transform_indices = @transform_5, window_bounds = array<i64: 32, 64>}, {pipeline_mode = #tpu.pipeline_mode<synchronous>, transform_indices = @transform_6, window_bounds = array<i64: 6, 32, 32>}, {pipeline_mode = #tpu.pipeline_mode<synchronous>, transform_indices = @transform_7, window_bounds = array<i64: 32, 64>}, {pipeline_mode = #tpu.pipeline_mode<synchronous>, transform_indices = @transform_8, window_bounds = array<i64: 64, 32>}, {pipeline_mode = #tpu.pipeline_mode<synchronous>, transform_indices = @transform_9, window_bounds = array<i64: 1, 64>}, {pipeline_mode = #tpu.pipeline_mode<synchronous>, transform_indices = @transform_10, window_bounds = array<i64: 16, 32>}, {transform_indices = @transform_11, window_bounds = array<i64: 1, 2, 128>}]} {
    %c0 = arith.constant 0 : index
    %c0_0 = arith.constant 0 : index
    %0 = vector.load %arg11[%c0, %c0_0] : memref<16x32xf32, #tpu.memory_space<vmem>>, vector<16x32xf32>
    %c0_1 = arith.constant 0 : index
    %c0_2 = arith.constant 0 : index
    %1 = vector.load %arg5[%c0_1, %c0_2] : memref<32x32xf32, #tpu.memory_space<vmem>>, vector<32x32xf32>
    %cst = arith.constant 0.353553385 : f32
    %2 = vector.broadcast %cst : f32 to vector<32x32xf32>
    %3 = arith.mulf %1, %2 : vector<32x32xf32>
    %c0_3 = arith.constant 0 : index
    %c0_4 = arith.constant 0 : index
    %c0_5 = arith.constant 0 : index
    %4 = vector.load %arg1[%c0_3, %c0_4, %c0_5] : memref<1x8x32xf32, #tpu.memory_space<vmem>>, vector<1x8x32xf32>
    %5 = vector.shape_cast %4 : vector<1x8x32xf32> to vector<8x32xf32>
    %c0_6 = arith.constant 0 : index
    %c0_7 = arith.constant 0 : index
    %c0_8 = arith.constant 0 : index
    %6 = vector.load %arg2[%c0_6, %c0_7, %c0_8] : memref<1x16x32xf32, #tpu.memory_space<vmem>>, vector<1x16x32xf32>
    %7 = vector.shape_cast %6 : vector<1x16x32xf32> to vector<16x32xf32>
    %c0_9 = arith.constant 0 : index
    %c0_10 = arith.constant 0 : index
    %c0_11 = arith.constant 0 : index
    %8 = vector.load %arg3[%c0_9, %c0_10, %c0_11] : memref<1x8x32xf32, #tpu.memory_space<vmem>>, vector<1x8x32xf32>
    %9 = vector.shape_cast %8 : vector<1x8x32xf32> to vector<8x32xf32>
    %c0_12 = arith.constant 0 : index
    %c0_13 = arith.constant 0 : index
    %c0_14 = arith.constant 0 : index
    %10 = vector.load %arg4[%c0_12, %c0_13, %c0_14] : memref<1x16x32xf32, #tpu.memory_space<vmem>>, vector<1x16x32xf32>
    %11 = vector.shape_cast %10 : vector<1x16x32xf32> to vector<16x32xf32>
    %12 = arith.addf %5, %9 : vector<8x32xf32>
    %c0_15 = arith.constant 0 : index
    %c0_16 = arith.constant 0 : index
    %13 = vector.load %arg6[%c0_15, %c0_16] : memref<32x64xbf16, #tpu.memory_space<vmem>>, vector<32x64xbf16>
    %14 = arith.truncf %12 : vector<8x32xf32> to vector<8x32xbf16>
    %cst_17 = arith.constant dense<0.000000e+00> : vector<8x64xf32>
    %15 = tpu.matmul %14, %13, %cst_17 {dimension_numbers = #tpu.dot_dimension_numbers<[1], [0], [0], [1], [0, 0, 1, 1], [], []>} : vector<8x32xbf16>, vector<32x64xbf16>, vector<8x64xf32> -> vector<8x64xf32>
    %16 = vector.extract_strided_slice %15 {offsets = [0, 0], sizes = [8, 32], strides = [1, 1]} : vector<8x64xf32> to vector<8x32xf32>
    %17 = vector.extract_strided_slice %0 {offsets = [0, 0], sizes = [1, 32], strides = [1, 1]} : vector<16x32xf32> to vector<1x32xf32>
    %18 = vector.broadcast %17 : vector<1x32xf32> to vector<8x32xf32>
    %19 = arith.addf %16, %18 : vector<8x32xf32>
    %20 = vector.extract_strided_slice %15 {offsets = [0, 32], sizes = [8, 32], strides = [1, 1]} : vector<8x64xf32> to vector<8x32xf32>
    %21 = vector.extract_strided_slice %0 {offsets = [1, 0], sizes = [1, 32], strides = [1, 1]} : vector<16x32xf32> to vector<1x32xf32>
    %22 = vector.broadcast %21 : vector<1x32xf32> to vector<8x32xf32>
    %23 = arith.addf %20, %22 : vector<8x32xf32>
    %c0_18 = arith.constant 0 : index
    %c0_19 = arith.constant 0 : index
    %c0_20 = arith.constant 0 : index
    %24 = vector.load %arg7[%c0_18, %c0_19, %c0_20] : memref<6x32x32xbf16, #tpu.memory_space<vmem>>, vector<1x32x32xbf16>
    %25 = vector.shape_cast %24 : vector<1x32x32xbf16> to vector<32x32xbf16>
    %26 = arith.truncf %5 : vector<8x32xf32> to vector<8x32xbf16>
    %cst_21 = arith.constant dense<0.000000e+00> : vector<8x32xf32>
    %27 = tpu.matmul %26, %25, %cst_21 {dimension_numbers = #tpu.dot_dimension_numbers<[1], [0], [0], [1], [0, 0, 1, 1], [], []>} : vector<8x32xbf16>, vector<32x32xbf16>, vector<8x32xf32> -> vector<8x32xf32>
    %28 = vector.extract_strided_slice %0 {offsets = [2, 0], sizes = [1, 32], strides = [1, 1]} : vector<16x32xf32> to vector<1x32xf32>
    %29 = vector.broadcast %28 : vector<1x32xf32> to vector<8x32xf32>
    %30 = arith.addf %27, %29 : vector<8x32xf32>
    %c1 = arith.constant 1 : index
    %c0_22 = arith.constant 0 : index
    %c0_23 = arith.constant 0 : index
    %31 = vector.load %arg7[%c1, %c0_22, %c0_23] : memref<6x32x32xbf16, #tpu.memory_space<vmem>>, vector<1x32x32xbf16>
    %32 = vector.shape_cast %31 : vector<1x32x32xbf16> to vector<32x32xbf16>
    %33 = vector.extract_strided_slice %0 {offsets = [3, 0], sizes = [1, 32], strides = [1, 1]} : vector<16x32xf32> to vector<1x32xf32>
    %34 = arith.truncf %23 : vector<8x32xf32> to vector<8x32xbf16>
    %35 = arith.truncf %30 : vector<8x32xf32> to vector<8x32xbf16>
    %36 = vector.shape_cast %19 : vector<8x32xf32> to vector<1x8x32xf32>
    %37 = vector.shape_cast %36 : vector<1x8x32xf32> to vector<1x8x32xf32>
    %38 = vector.broadcast %37 : vector<1x8x32xf32> to vector<4x8x32xf32>
    %39 = vector.shape_cast %38 : vector<4x8x32xf32> to vector<32x32xf32>
    %40 = arith.mulf %39, %3 : vector<32x32xf32>
    %41 = arith.truncf %40 : vector<32x32xf32> to vector<32x32xbf16>
    %cst_24 = arith.constant dense<0.000000e+00> : vector<32x8xf32>
    %42 = tpu.matmul %41, %34, %cst_24 {dimension_numbers = #tpu.dot_dimension_numbers<[1], [1], [0], [0], [0, 0, 1, 0], [], []>} : vector<32x32xbf16>, vector<8x32xbf16>, vector<32x8xf32> -> vector<32x8xf32>
    %cst_25 = arith.constant dense<0xFF800000> : vector<32xf32>
    %43 = vector.multi_reduction <maximumf>, %42, %cst_25 [1] : vector<32x8xf32> to vector<32xf32>
    %44 = vector.shape_cast %43 : vector<32xf32> to vector<32x1xf32>
    %45 = vector.broadcast %44 : vector<32x1xf32> to vector<32x8xf32>
    %46 = arith.subf %42, %45 : vector<32x8xf32>
    %47 = math.exp %46 : vector<32x8xf32>
    %cst_26 = arith.constant dense<0.000000e+00> : vector<32xf32>
    %48 = vector.multi_reduction <add>, %47, %cst_26 [1] : vector<32x8xf32> to vector<32xf32>
    %49 = vector.shape_cast %48 : vector<32xf32> to vector<32x1xf32>
    %50 = tpu.reciprocal %49 {approx = true} : vector<32x1xf32> -> vector<32x1xf32>
    %51 = vector.broadcast %50 : vector<32x1xf32> to vector<32x8xf32>
    %52 = arith.mulf %47, %51 : vector<32x8xf32>
    %53 = arith.truncf %52 : vector<32x8xf32> to vector<32x8xbf16>
    %cst_27 = arith.constant dense<0.000000e+00> : vector<32x32xf32>
    %54 = tpu.matmul %53, %35, %cst_27 {dimension_numbers = #tpu.dot_dimension_numbers<[1], [0], [0], [1], [0, 0, 1, 1], [], []>} : vector<32x8xbf16>, vector<8x32xbf16>, vector<32x32xf32> -> vector<32x32xf32>
    %55 = arith.mulf %54, %1 : vector<32x32xf32>
    %56 = vector.shape_cast %55 : vector<32x32xf32> to vector<4x8x32xf32>
    %cst_28 = arith.constant dense<0.000000e+00> : vector<8x32xf32>
    %57 = vector.multi_reduction <add>, %56, %cst_28 [0] : vector<4x8x32xf32> to vector<8x32xf32>
    %58 = arith.truncf %57 : vector<8x32xf32> to vector<8x32xbf16>
    %cst_29 = arith.constant dense<0.000000e+00> : vector<8x32xf32>
    %59 = tpu.matmul %58, %32, %cst_29 {dimension_numbers = #tpu.dot_dimension_numbers<[1], [0], [0], [1], [0, 0, 1, 1], [], []>} : vector<8x32xbf16>, vector<32x32xbf16>, vector<8x32xf32> -> vector<8x32xf32>
    %60 = vector.broadcast %33 : vector<1x32xf32> to vector<8x32xf32>
    %61 = arith.addf %59, %60 : vector<8x32xf32>
    %62 = arith.addf %5, %61 : vector<8x32xf32>
    %cst_30 = arith.constant dense<0.000000e+00> : vector<8xf32>
    %63 = vector.multi_reduction <add>, %62, %cst_30 [1] : vector<8x32xf32> to vector<8xf32>
    %64 = vector.shape_cast %63 : vector<8xf32> to vector<8x1xf32>
    %cst_31 = arith.constant 3.200000e+01 : f32
    %65 = vector.broadcast %cst_31 : f32 to vector<8x1xf32>
    %66 = arith.divf %64, %65 : vector<8x1xf32>
    %67 = vector.broadcast %66 : vector<8x1xf32> to vector<8x32xf32>
    %68 = arith.subf %62, %67 : vector<8x32xf32>
    %69 = arith.mulf %68, %68 : vector<8x32xf32>
    %cst_32 = arith.constant dense<0.000000e+00> : vector<8xf32>
    %70 = vector.multi_reduction <add>, %69, %cst_32 [1] : vector<8x32xf32> to vector<8xf32>
    %71 = vector.shape_cast %70 : vector<8xf32> to vector<8x1xf32>
    %cst_33 = arith.constant 3.200000e+01 : f32
    %72 = vector.broadcast %cst_33 : f32 to vector<8x1xf32>
    %73 = arith.divf %71, %72 : vector<8x1xf32>
    %cst_34 = arith.constant 9.99999974E-6 : f32
    %74 = vector.broadcast %cst_34 : f32 to vector<8x1xf32>
    %75 = arith.addf %73, %74 : vector<8x1xf32>
    %76 = math.rsqrt %75 : vector<8x1xf32>
    %77 = vector.broadcast %76 : vector<8x1xf32> to vector<8x32xf32>
    %78 = arith.mulf %68, %77 : vector<8x32xf32>
    %79 = vector.extract_strided_slice %0 {offsets = [9, 0], sizes = [1, 32], strides = [1, 1]} : vector<16x32xf32> to vector<1x32xf32>
    %80 = vector.broadcast %79 : vector<1x32xf32> to vector<8x32xf32>
    %81 = arith.mulf %78, %80 : vector<8x32xf32>
    %82 = vector.extract_strided_slice %0 {offsets = [10, 0], sizes = [1, 32], strides = [1, 1]} : vector<16x32xf32> to vector<1x32xf32>
    %83 = vector.broadcast %82 : vector<1x32xf32> to vector<8x32xf32>
    %84 = arith.addf %81, %83 : vector<8x32xf32>
    %85 = arith.addf %84, %9 : vector<8x32xf32>
    %c2 = arith.constant 2 : index
    %c0_35 = arith.constant 0 : index
    %c0_36 = arith.constant 0 : index
    %86 = vector.load %arg7[%c2, %c0_35, %c0_36] : memref<6x32x32xbf16, #tpu.memory_space<vmem>>, vector<1x32x32xbf16>
    %87 = vector.shape_cast %86 : vector<1x32x32xbf16> to vector<32x32xbf16>
    %88 = arith.truncf %85 : vector<8x32xf32> to vector<8x32xbf16>
    %cst_37 = arith.constant dense<0.000000e+00> : vector<8x32xf32>
    %89 = tpu.matmul %88, %87, %cst_37 {dimension_numbers = #tpu.dot_dimension_numbers<[1], [0], [0], [1], [0, 0, 1, 1], [], []>} : vector<8x32xbf16>, vector<32x32xbf16>, vector<8x32xf32> -> vector<8x32xf32>
    %90 = vector.extract_strided_slice %0 {offsets = [4, 0], sizes = [1, 32], strides = [1, 1]} : vector<16x32xf32> to vector<1x32xf32>
    %91 = vector.broadcast %90 : vector<1x32xf32> to vector<8x32xf32>
    %92 = arith.addf %89, %91 : vector<8x32xf32>
    %93 = arith.addf %7, %11 : vector<16x32xf32>
    %c3 = arith.constant 3 : index
    %c0_38 = arith.constant 0 : index
    %c0_39 = arith.constant 0 : index
    %94 = vector.load %arg7[%c3, %c0_38, %c0_39] : memref<6x32x32xbf16, #tpu.memory_space<vmem>>, vector<1x32x32xbf16>
    %95 = vector.shape_cast %94 : vector<1x32x32xbf16> to vector<32x32xbf16>
    %96 = arith.truncf %93 : vector<16x32xf32> to vector<16x32xbf16>
    %cst_40 = arith.constant dense<0.000000e+00> : vector<16x32xf32>
    %97 = tpu.matmul %96, %95, %cst_40 {dimension_numbers = #tpu.dot_dimension_numbers<[1], [0], [0], [1], [0, 0, 1, 1], [], []>} : vector<16x32xbf16>, vector<32x32xbf16>, vector<16x32xf32> -> vector<16x32xf32>
    %98 = vector.extract_strided_slice %0 {offsets = [5, 0], sizes = [1, 32], strides = [1, 1]} : vector<16x32xf32> to vector<1x32xf32>
    %99 = vector.broadcast %98 : vector<1x32xf32> to vector<16x32xf32>
    %100 = arith.addf %97, %99 : vector<16x32xf32>
    %c4 = arith.constant 4 : index
    %c0_41 = arith.constant 0 : index
    %c0_42 = arith.constant 0 : index
    %101 = vector.load %arg7[%c4, %c0_41, %c0_42] : memref<6x32x32xbf16, #tpu.memory_space<vmem>>, vector<1x32x32xbf16>
    %102 = vector.shape_cast %101 : vector<1x32x32xbf16> to vector<32x32xbf16>
    %103 = arith.truncf %7 : vector<16x32xf32> to vector<16x32xbf16>
    %cst_43 = arith.constant dense<0.000000e+00> : vector<16x32xf32>
    %104 = tpu.matmul %103, %102, %cst_43 {dimension_numbers = #tpu.dot_dimension_numbers<[1], [0], [0], [1], [0, 0, 1, 1], [], []>} : vector<16x32xbf16>, vector<32x32xbf16>, vector<16x32xf32> -> vector<16x32xf32>
    %105 = vector.extract_strided_slice %0 {offsets = [6, 0], sizes = [1, 32], strides = [1, 1]} : vector<16x32xf32> to vector<1x32xf32>
    %106 = vector.broadcast %105 : vector<1x32xf32> to vector<16x32xf32>
    %107 = arith.addf %104, %106 : vector<16x32xf32>
    %c5 = arith.constant 5 : index
    %c0_44 = arith.constant 0 : index
    %c0_45 = arith.constant 0 : index
    %108 = vector.load %arg7[%c5, %c0_44, %c0_45] : memref<6x32x32xbf16, #tpu.memory_space<vmem>>, vector<1x32x32xbf16>
    %109 = vector.shape_cast %108 : vector<1x32x32xbf16> to vector<32x32xbf16>
    %110 = vector.extract_strided_slice %0 {offsets = [7, 0], sizes = [1, 32], strides = [1, 1]} : vector<16x32xf32> to vector<1x32xf32>
    %111 = arith.truncf %100 : vector<16x32xf32> to vector<16x32xbf16>
    %112 = arith.truncf %107 : vector<16x32xf32> to vector<16x32xbf16>
    %113 = vector.shape_cast %92 : vector<8x32xf32> to vector<1x8x32xf32>
    %114 = vector.shape_cast %113 : vector<1x8x32xf32> to vector<1x8x32xf32>
    %115 = vector.broadcast %114 : vector<1x8x32xf32> to vector<4x8x32xf32>
    %116 = vector.shape_cast %115 : vector<4x8x32xf32> to vector<32x32xf32>
    %117 = arith.mulf %116, %3 : vector<32x32xf32>
    %118 = arith.truncf %117 : vector<32x32xf32> to vector<32x32xbf16>
    %cst_46 = arith.constant dense<0.000000e+00> : vector<32x16xf32>
    %119 = tpu.matmul %118, %111, %cst_46 {dimension_numbers = #tpu.dot_dimension_numbers<[1], [1], [0], [0], [0, 0, 1, 0], [], []>} : vector<32x32xbf16>, vector<16x32xbf16>, vector<32x16xf32> -> vector<32x16xf32>
    %cst_47 = arith.constant dense<0xFF800000> : vector<32xf32>
    %120 = vector.multi_reduction <maximumf>, %119, %cst_47 [1] : vector<32x16xf32> to vector<32xf32>
    %121 = vector.shape_cast %120 : vector<32xf32> to vector<32x1xf32>
    %122 = vector.broadcast %121 : vector<32x1xf32> to vector<32x16xf32>
    %123 = arith.subf %119, %122 : vector<32x16xf32>
    %124 = math.exp %123 : vector<32x16xf32>
    %cst_48 = arith.constant dense<0.000000e+00> : vector<32xf32>
    %125 = vector.multi_reduction <add>, %124, %cst_48 [1] : vector<32x16xf32> to vector<32xf32>
    %126 = vector.shape_cast %125 : vector<32xf32> to vector<32x1xf32>
    %127 = tpu.reciprocal %126 {approx = true} : vector<32x1xf32> -> vector<32x1xf32>
    %128 = vector.broadcast %127 : vector<32x1xf32> to vector<32x16xf32>
    %129 = arith.mulf %124, %128 : vector<32x16xf32>
    %130 = arith.truncf %129 : vector<32x16xf32> to vector<32x16xbf16>
    %cst_49 = arith.constant dense<0.000000e+00> : vector<32x32xf32>
    %131 = tpu.matmul %130, %112, %cst_49 {dimension_numbers = #tpu.dot_dimension_numbers<[1], [0], [0], [1], [0, 0, 1, 1], [], []>} : vector<32x16xbf16>, vector<16x32xbf16>, vector<32x32xf32> -> vector<32x32xf32>
    %132 = arith.mulf %131, %1 : vector<32x32xf32>
    %133 = vector.shape_cast %132 : vector<32x32xf32> to vector<4x8x32xf32>
    %cst_50 = arith.constant dense<0.000000e+00> : vector<8x32xf32>
    %134 = vector.multi_reduction <add>, %133, %cst_50 [0] : vector<4x8x32xf32> to vector<8x32xf32>
    %135 = arith.truncf %134 : vector<8x32xf32> to vector<8x32xbf16>
    %cst_51 = arith.constant dense<0.000000e+00> : vector<8x32xf32>
    %136 = tpu.matmul %135, %109, %cst_51 {dimension_numbers = #tpu.dot_dimension_numbers<[1], [0], [0], [1], [0, 0, 1, 1], [], []>} : vector<8x32xbf16>, vector<32x32xbf16>, vector<8x32xf32> -> vector<8x32xf32>
    %137 = vector.broadcast %110 : vector<1x32xf32> to vector<8x32xf32>
    %138 = arith.addf %136, %137 : vector<8x32xf32>
    %139 = arith.addf %84, %138 : vector<8x32xf32>
    %cst_52 = arith.constant dense<0.000000e+00> : vector<8xf32>
    %140 = vector.multi_reduction <add>, %139, %cst_52 [1] : vector<8x32xf32> to vector<8xf32>
    %141 = vector.shape_cast %140 : vector<8xf32> to vector<8x1xf32>
    %cst_53 = arith.constant 3.200000e+01 : f32
    %142 = vector.broadcast %cst_53 : f32 to vector<8x1xf32>
    %143 = arith.divf %141, %142 : vector<8x1xf32>
    %144 = vector.broadcast %143 : vector<8x1xf32> to vector<8x32xf32>
    %145 = arith.subf %139, %144 : vector<8x32xf32>
    %146 = arith.mulf %145, %145 : vector<8x32xf32>
    %cst_54 = arith.constant dense<0.000000e+00> : vector<8xf32>
    %147 = vector.multi_reduction <add>, %146, %cst_54 [1] : vector<8x32xf32> to vector<8xf32>
    %148 = vector.shape_cast %147 : vector<8xf32> to vector<8x1xf32>
    %cst_55 = arith.constant 3.200000e+01 : f32
    %149 = vector.broadcast %cst_55 : f32 to vector<8x1xf32>
    %150 = arith.divf %148, %149 : vector<8x1xf32>
    %cst_56 = arith.constant 9.99999974E-6 : f32
    %151 = vector.broadcast %cst_56 : f32 to vector<8x1xf32>
    %152 = arith.addf %150, %151 : vector<8x1xf32>
    %153 = math.rsqrt %152 : vector<8x1xf32>
    %154 = vector.broadcast %153 : vector<8x1xf32> to vector<8x32xf32>
    %155 = arith.mulf %145, %154 : vector<8x32xf32>
    %156 = vector.extract_strided_slice %0 {offsets = [11, 0], sizes = [1, 32], strides = [1, 1]} : vector<16x32xf32> to vector<1x32xf32>
    %157 = vector.broadcast %156 : vector<1x32xf32> to vector<8x32xf32>
    %158 = arith.mulf %155, %157 : vector<8x32xf32>
    %159 = vector.extract_strided_slice %0 {offsets = [12, 0], sizes = [1, 32], strides = [1, 1]} : vector<16x32xf32> to vector<1x32xf32>
    %160 = vector.broadcast %159 : vector<1x32xf32> to vector<8x32xf32>
    %161 = arith.addf %158, %160 : vector<8x32xf32>
    %c0_57 = arith.constant 0 : index
    %c0_58 = arith.constant 0 : index
    %162 = vector.load %arg8[%c0_57, %c0_58] : memref<32x64xbf16, #tpu.memory_space<vmem>>, vector<32x64xbf16>
    %163 = arith.truncf %161 : vector<8x32xf32> to vector<8x32xbf16>
    %cst_59 = arith.constant dense<0.000000e+00> : vector<8x64xf32>
    %164 = tpu.matmul %163, %162, %cst_59 {dimension_numbers = #tpu.dot_dimension_numbers<[1], [0], [0], [1], [0, 0, 1, 1], [], []>} : vector<8x32xbf16>, vector<32x64xbf16>, vector<8x64xf32> -> vector<8x64xf32>
    %c0_60 = arith.constant 0 : index
    %c0_61 = arith.constant 0 : index
    %165 = vector.load %arg10[%c0_60, %c0_61] : memref<1x64xf32, #tpu.memory_space<vmem>>, vector<1x64xf32>
    %166 = vector.broadcast %165 : vector<1x64xf32> to vector<8x64xf32>
    %167 = arith.addf %164, %166 : vector<8x64xf32>
    %cst_62 = arith.constant 0.000000e+00 : f32
    %168 = vector.broadcast %cst_62 : f32 to vector<8x64xf32>
    %169 = arith.maximumf %167, %168 : vector<8x64xf32>
    %c0_63 = arith.constant 0 : index
    %c0_64 = arith.constant 0 : index
    %170 = vector.load %arg9[%c0_63, %c0_64] : memref<64x32xbf16, #tpu.memory_space<vmem>>, vector<64x32xbf16>
    %171 = arith.truncf %169 : vector<8x64xf32> to vector<8x64xbf16>
    %cst_65 = arith.constant dense<0.000000e+00> : vector<8x32xf32>
    %172 = tpu.matmul %171, %170, %cst_65 {dimension_numbers = #tpu.dot_dimension_numbers<[1], [0], [0], [1], [0, 0, 1, 1], [], []>} : vector<8x64xbf16>, vector<64x32xbf16>, vector<8x32xf32> -> vector<8x32xf32>
    %173 = vector.extract_strided_slice %0 {offsets = [8, 0], sizes = [1, 32], strides = [1, 1]} : vector<16x32xf32> to vector<1x32xf32>
    %174 = vector.broadcast %173 : vector<1x32xf32> to vector<8x32xf32>
    %175 = arith.addf %172, %174 : vector<8x32xf32>
    %176 = arith.addf %161, %175 : vector<8x32xf32>
    %cst_66 = arith.constant dense<0.000000e+00> : vector<8xf32>
    %177 = vector.multi_reduction <add>, %176, %cst_66 [1] : vector<8x32xf32> to vector<8xf32>
    %178 = vector.shape_cast %177 : vector<8xf32> to vector<8x1xf32>
    %cst_67 = arith.constant 3.200000e+01 : f32
    %179 = vector.broadcast %cst_67 : f32 to vector<8x1xf32>
    %180 = arith.divf %178, %179 : vector<8x1xf32>
    %181 = vector.broadcast %180 : vector<8x1xf32> to vector<8x32xf32>
    %182 = arith.subf %176, %181 : vector<8x32xf32>
    %183 = arith.mulf %182, %182 : vector<8x32xf32>
    %cst_68 = arith.constant dense<0.000000e+00> : vector<8xf32>
    %184 = vector.multi_reduction <add>, %183, %cst_68 [1] : vector<8x32xf32> to vector<8xf32>
    %185 = vector.shape_cast %184 : vector<8xf32> to vector<8x1xf32>
    %cst_69 = arith.constant 3.200000e+01 : f32
    %186 = vector.broadcast %cst_69 : f32 to vector<8x1xf32>
    %187 = arith.divf %185, %186 : vector<8x1xf32>
    %cst_70 = arith.constant 9.99999974E-6 : f32
    %188 = vector.broadcast %cst_70 : f32 to vector<8x1xf32>
    %189 = arith.addf %187, %188 : vector<8x1xf32>
    %190 = math.rsqrt %189 : vector<8x1xf32>
    %191 = vector.broadcast %190 : vector<8x1xf32> to vector<8x32xf32>
    %192 = arith.mulf %182, %191 : vector<8x32xf32>
    %193 = vector.extract_strided_slice %0 {offsets = [13, 0], sizes = [1, 32], strides = [1, 1]} : vector<16x32xf32> to vector<1x32xf32>
    %194 = vector.broadcast %193 : vector<1x32xf32> to vector<8x32xf32>
    %195 = arith.mulf %192, %194 : vector<8x32xf32>
    %196 = vector.extract_strided_slice %0 {offsets = [14, 0], sizes = [1, 32], strides = [1, 1]} : vector<16x32xf32> to vector<1x32xf32>
    %197 = vector.broadcast %196 : vector<1x32xf32> to vector<8x32xf32>
    %198 = arith.addf %195, %197 : vector<8x32xf32>
    %199 = vector.extract_strided_slice %198 {offsets = [0, 0], sizes = [2, 32], strides = [1, 1]} : vector<8x32xf32> to vector<2x32xf32>
    %200 = vector.extract_strided_slice %198 {offsets = [2, 0], sizes = [2, 32], strides = [1, 1]} : vector<8x32xf32> to vector<2x32xf32>
    %201 = vector.extract_strided_slice %198 {offsets = [4, 0], sizes = [2, 32], strides = [1, 1]} : vector<8x32xf32> to vector<2x32xf32>
    %202 = vector.extract_strided_slice %198 {offsets = [6, 0], sizes = [2, 32], strides = [1, 1]} : vector<8x32xf32> to vector<2x32xf32>
    %203 = tpu.concatenate %199, %200, %201, %202 in 1 : vector<2x32xf32>, vector<2x32xf32>, vector<2x32xf32>, vector<2x32xf32> -> vector<2x128xf32>
    %c0_71 = arith.constant 0 : index
    %c0_72 = arith.constant 0 : index
    %c0_73 = arith.constant 0 : index
    %204 = vector.load %arg12[%c0_71, %c0_72, %c0_73] : memref<1x2x128xf32, #tpu.memory_space<vmem>>, vector<1x2x128xf32>
    %205 = vector.shape_cast %204 : vector<1x2x128xf32> to vector<2x128xf32>
    %206 = vector.shape_cast %203 : vector<2x128xf32> to vector<1x2x128xf32>
    tpu.vector_store %arg12[%c0_71, %c0_72, %c0_73], %206 {strides = array<i32>} : memref<1x2x128xf32, #tpu.memory_space<vmem>>, vector<1x2x128xf32>,
    return
  }
  func.func @transform_0(%arg0: i32) -> (i32, i32, i32) {
    %c0_i32 = arith.constant 0 : i32
    %c0_i32_0 = arith.constant 0 : i32
    %c0_i32_1 = arith.constant 0 : i32
    return %arg0, %c0_i32, %c0_i32_0 : i32, i32, i32
  }
  func.func @transform_1(%arg0: i32) -> (i32, i32, i32) {
    %c0_i32 = arith.constant 0 : i32
    %c0_i32_0 = arith.constant 0 : i32
    %c0_i32_1 = arith.constant 0 : i32
    return %arg0, %c0_i32, %c0_i32_0 : i32, i32, i32
  }
  func.func @transform_2(%arg0: i32) -> (i32, i32, i32) {
    %c0_i32 = arith.constant 0 : i32
    %c0_i32_0 = arith.constant 0 : i32
    %c0_i32_1 = arith.constant 0 : i32
    return %arg0, %c0_i32, %c0_i32_0 : i32, i32, i32
  }
  func.func @transform_3(%arg0: i32) -> (i32, i32, i32) {
    %c0_i32 = arith.constant 0 : i32
    %c0_i32_0 = arith.constant 0 : i32
    %c0_i32_1 = arith.constant 0 : i32
    return %arg0, %c0_i32, %c0_i32_0 : i32, i32, i32
  }
  func.func @transform_4(%arg0: i32) -> (i32, i32) {
    %c0_i32 = arith.constant 0 : i32
    %c0_i32_0 = arith.constant 0 : i32
    %c0_i32_1 = arith.constant 0 : i32
    return %c0_i32, %c0_i32_0 : i32, i32
  }
  func.func @transform_5(%arg0: i32) -> (i32, i32) {
    %c0_i32 = arith.constant 0 : i32
    %c0_i32_0 = arith.constant 0 : i32
    %c0_i32_1 = arith.constant 0 : i32
    return %c0_i32, %c0_i32_0 : i32, i32
  }
  func.func @transform_6(%arg0: i32) -> (i32, i32, i32) {
    %c0_i32 = arith.constant 0 : i32
    %c0_i32_0 = arith.constant 0 : i32
    %c0_i32_1 = arith.constant 0 : i32
    %c0_i32_2 = arith.constant 0 : i32
    return %c0_i32, %c0_i32_0, %c0_i32_1 : i32, i32, i32
  }
  func.func @transform_7(%arg0: i32) -> (i32, i32) {
    %c0_i32 = arith.constant 0 : i32
    %c0_i32_0 = arith.constant 0 : i32
    %c0_i32_1 = arith.constant 0 : i32
    return %c0_i32, %c0_i32_0 : i32, i32
  }
  func.func @transform_8(%arg0: i32) -> (i32, i32) {
    %c0_i32 = arith.constant 0 : i32
    %c0_i32_0 = arith.constant 0 : i32
    %c0_i32_1 = arith.constant 0 : i32
    return %c0_i32, %c0_i32_0 : i32, i32
  }
  func.func @transform_9(%arg0: i32) -> (i32, i32) {
    %c0_i32 = arith.constant 0 : i32
    %c0_i32_0 = arith.constant 0 : i32
    %c0_i32_1 = arith.constant 0 : i32
    return %c0_i32, %c0_i32_0 : i32, i32
  }
  func.func @transform_10(%arg0: i32) -> (i32, i32) {
    %c0_i32 = arith.constant 0 : i32
    %c0_i32_0 = arith.constant 0 : i32
    %c0_i32_1 = arith.constant 0 : i32
    return %c0_i32, %c0_i32_0 : i32, i32
  }
  func.func @transform_11(%arg0: i32) -> (i32, i32, i32) {
    %c0_i32 = arith.constant 0 : i32
    %c0_i32_0 = arith.constant 0 : i32
    %c0_i32_1 = arith.constant 0 : i32
    return %arg0, %c0_i32, %c0_i32_0 : i32, i32, i32
  }
}

</mosaic_0001>

<llo_original>
// kernel: tpu_custom_call.1
$region0: #{tpu_custom_call.1}
  #allocation0 [shape = 'u32[]', space=smem, size = 0x4, offset = 0x4, fixed_abs, tag = 'smem constant byte address 0x4 - core index']
  #allocation1 [shape = 'u32[144,128]{1,0:T(1,128)}', space=vmem, size = 0x12000, scoped, tag = 'internal scratch']
  %s0 = inlined_call_operand.vmem [shape: f32[2,8,32], index: 0, kind: input, shape index: {}]
  %s1 = inlined_call_operand.vmem [shape: f32[2,16,32], index: 1, kind: input, shape index: {}]
  %s2 = inlined_call_operand.hbm [shape: f32[2,8,32], index: 2, kind: input, shape index: {}]
  %s3 = inlined_call_operand.hbm [shape: f32[2,16,32], index: 3, kind: input, shape index: {}]
  %s4 = inlined_call_operand.hbm [shape: f32[32,32], index: 4, kind: input, shape index: {}]
  %s5 = inlined_call_operand.hbm [shape: bf16[32,64], index: 5, kind: input, shape index: {}]
  %s6 = inlined_call_operand.hbm [shape: bf16[6,32,32], index: 6, kind: input, shape index: {}]
  %s7 = inlined_call_operand.hbm [shape: bf16[32,64], index: 7, kind: input, shape index: {}]
  %s8 = inlined_call_operand.vmem [shape: bf16[64,32], index: 8, kind: input, shape index: {}]
  %s9 = inlined_call_operand.hbm [shape: f32[1,64], index: 9, kind: input, shape index: {}]
  %s10 = inlined_call_operand.vmem [shape: f32[16,32], index: 10, kind: input, shape index: {}]
  %s11 = inlined_call_operand.hbm [shape: f32[2,2,128], index: 11, kind: output, shape index: {}]
  %s12 = sld [smem:[#allocation0]]
  $region105: #{tpu_custom_call.1} parent=0
    _
  %s14 = ssub.s32 1, %s12
  %s15 = scalar_select 0, %s14, %s12
  $region1: #{tpu_custom_call.1} parent=0
    #allocation2 [shape = 'u8[8192]{0}', space=vmem, size = 0x2000, scoped, tag = 'input window, operand 2']
    #allocation3 [shape = 's32[2]{0}', space=sflag, size = 0x8, scoped, tag = 'scoped memory for tpu_custom_call.1']
    #allocation4 [shape = 's32[2]{0}', space=sflag, size = 0x8, scoped, tag = 'scoped memory for tpu_custom_call.1']
    #allocation5 [shape = 'u8[16384]{0}', space=vmem, size = 0x4000, scoped, tag = 'input window, operand 3']
    #allocation6 [shape = 's32[2]{0}', space=sflag, size = 0x8, scoped, tag = 'scoped memory for tpu_custom_call.1']
    #allocation7 [shape = 'u8[16384]{0}', space=vmem, size = 0x4000, scoped, tag = 'input window, operand 4, single buffered']
    #allocation8 [shape = 'u8[8192]{0}', space=vmem, size = 0x2000, scoped, tag = 'input window, operand 5, single buffered']
    #allocation9 [shape = 's32[1]{0}', space=sflag, size = 0x4, scoped, tag = 'scoped memory for tpu_custom_call.1']
    #allocation10 [shape = 'u8[49152]{0}', space=vmem, size = 0xc000, scoped, tag = 'input window, operand 6, single buffered']
    #allocation11 [shape = 'u8[8192]{0}', space=vmem, size = 0x2000, scoped, tag = 'input window, operand 7, single buffered']
    #allocation12 [shape = 's32[1]{0}', space=sflag, size = 0x4, scoped, tag = 'scoped memory for tpu_custom_call.1']
    #allocation13 [shape = 'u8[512]{0}', space=vmem, size = 0x400, scoped, tag = 'input window, operand 9, single buffered']
    #allocation14 [shape = 'u8[2048]{0}', space=vmem, size = 0x800, scoped, tag = 'output window, operand 0']
    %16 = vsyncpa [#allocation3], 0
    %s17 = scalar_lea.sflag [#allocation3], 1
    %18 = vsyncpa %s17, 0
    %19 = vsyncpa [#allocation6], 0
    %s20 = scalar_lea.sflag [#allocation6], 1
    %21 = vsyncpa %s20, 0
    %22 = vsyncpa [#allocation9], 0
    %23 = vsyncpa [#allocation12], 0
    %24 = vsyncpa [#allocation4], 0
    %s25 = scalar_lea.sflag [#allocation4], 1
    %26 = vsyncpa %s25, 0
    loop: start=0, step=1, limit=4
    $region2: #{tpu_custom_call.1} parent=1 // loop_pre_header
      _
    $region3: #{tpu_custom_call.1} parent=1 // loop_header
      %s28 = sphi 0, %s32
      %p29 = scmp.ge.s32.totalorder %s28, 4
      %s38 = sphi 0, %s40
      %s41 = sphi 0, %s38
      %s42 = sphi 0, %s41
      %s58 = sphi 0, %s42
      %s64 = sphi 0, %s66
      %s67 = sphi 0, %s64
      %s68 = sphi 0, %s67
      %s84 = sphi 0, %s68
      %s90 = sphi 0, %s92
      %s93 = sphi 0, %s90
      %s94 = sphi 0, %s93
      %s110 = sphi 0, %s94
      %s116 = sphi 0, %s118
      %s119 = sphi 0, %s116
      %s120 = sphi 0, %s119
      %s136 = sphi 0, %s120
      %s140 = sphi 0, %s140
      %s142 = sphi 0, %s140
      %s143 = sphi 0, %s142
      %s157 = sphi 0, %s143
      %s161 = sphi 0, %s161
      %s163 = sphi 0, %s161
      %s164 = sphi 0, %s163
      %s178 = sphi 0, %s164
      %s182 = sphi 0, %s182
      %s184 = sphi 0, %s182
      %s185 = sphi 0, %s184
      %s199 = sphi 0, %s185
      %s203 = sphi 0, %s203
      %s205 = sphi 0, %s203
      %s206 = sphi 0, %s205
      %s220 = sphi 0, %s206
      %s224 = sphi 0, %s224
      %s226 = sphi 0, %s224
      %s227 = sphi 0, %s226
      %s241 = sphi 0, %s227
      %s245 = sphi 0, %s245
      %s247 = sphi 0, %s245
      %s248 = sphi 0, %s247
      %s262 = sphi 0, %s248
      %s266 = sphi 0, %s266
      %s268 = sphi 0, %s266
      %s269 = sphi 0, %s268
      %s283 = sphi 0, %s269
      %s289 = sphi 0, %s291
      %s292 = sphi 0, %s289
      %s293 = sphi 0, %s292
      %s309 = sphi 0, %s293
    $region4: #{tpu_custom_call.1} parent=1 // loop_header_branch
      %31 = sbr.rel (%p29) target = $region8
    $region5: #{tpu_custom_call.1} parent=1 // loop_body
      %s33 = ssub.s32 %s28, 1
      %s34 = ssub.s32 %s28, 2
      %s35 = sadd.s32 %s28, 1
      %s36 = ssub.s32 %s28, %s35
      %p37 = scmp.eq.s32.totalorder %s36, 0
      %s39 = sadd.s32 %s38, 1
      %s40 = scalar_select %p37, %s38, %s39
      %p43 = pneg %p37
      %p44 = scmp.eq.s32.totalorder %s28, 1
      %p45 = por %p43, %p44
      %p46 = scmp.ne.s32.totalorder %s38, %s41
      %p47 = scmp.eq.s32.totalorder %s28, 0
      %p48 = por %p46, %p47
      %p49 = scmp.ne.s32.totalorder %s38, %s41
      %p50 = scmp.eq.s32.totalorder %s33, 1
      %p51 = por %p49, %p50
      %p52 = scmp.ne.s32.totalorder %s41, %s42
      %p53 = scmp.eq.s32.totalorder %s33, 0
      %p54 = por %p52, %p53
      %p55 = scmp.ne.s32.totalorder %s41, %s42
      %p56 = scmp.eq.s32.totalorder %s34, 1
      %p57 = por %p55, %p56
      %p59 = scmp.ne.s32.totalorder %s42, %s58
      %p60 = scmp.eq.s32.totalorder %s34, 0
      %p61 = por %p59, %p60
      %s62 = ssub.s32 %s28, %s35
      %p63 = scmp.eq.s32.totalorder %s62, 0
      %s65 = sadd.s32 %s64, 1
      %s66 = scalar_select %p63, %s64, %s65
      %p69 = pneg %p63
      %p70 = scmp.eq.s32.totalorder %s28, 1
      %p71 = por %p69, %p70
      %p72 = scmp.ne.s32.totalorder %s64, %s67
      %p73 = scmp.eq.s32.totalorder %s28, 0
      %p74 = por %p72, %p73
      %p75 = scmp.ne.s32.totalorder %s64, %s67
      %p76 = scmp.eq.s32.totalorder %s33, 1
      %p77 = por %p75, %p76
      %p78 = scmp.ne.s32.totalorder %s67, %s68
      %p79 = scmp.eq.s32.totalorder %s33, 0
      %p80 = por %p78, %p79
      %p81 = scmp.ne.s32.totalorder %s67, %s68
      %p82 = scmp.eq.s32.totalorder %s34, 1
      %p83 = por %p81, %p82
      %p85 = scmp.ne.s32.totalorder %s68, %s84
      %p86 = scmp.eq.s32.totalorder %s34, 0
      %p87 = por %p85, %p86
      %s88 = ssub.s32 %s28, %s35
      %p89 = scmp.eq.s32.totalorder %s88, 0
      %s91 = sadd.s32 %s90, 1
      %s92 = scalar_select %p89, %s90, %s91
      %p95 = pneg %p89
      %p96 = scmp.eq.s32.totalorder %s28, 1
      %p97 = por %p95, %p96
      %p98 = scmp.ne.s32.totalorder %s90, %s93
      %p99 = scmp.eq.s32.totalorder %s28, 0
      %p100 = por %p98, %p99
      %p101 = scmp.ne.s32.totalorder %s90, %s93
      %p102 = scmp.eq.s32.totalorder %s33, 1
      %p103 = por %p101, %p102
      %p104 = scmp.ne.s32.totalorder %s93, %s94
      %p105 = scmp.eq.s32.totalorder %s33, 0
      %p106 = por %p104, %p105
      %p107 = scmp.ne.s32.totalorder %s93, %s94
      %p108 = scmp.eq.s32.totalorder %s34, 1
      %p109 = por %p107, %p108
      %p111 = scmp.ne.s32.totalorder %s94, %s110
      %p112 = scmp.eq.s32.totalorder %s34, 0
      %p113 = por %p111, %p112
      %s114 = ssub.s32 %s28, %s35
      %p115 = scmp.eq.s32.totalorder %s114, 0
      %s117 = sadd.s32 %s116, 1
      %s118 = scalar_select %p115, %s116, %s117
      %p121 = pneg %p115
      %p122 = scmp.eq.s32.totalorder %s28, 1
      %p123 = por %p121, %p122
      %p124 = scmp.ne.s32.totalorder %s116, %s119
      %p125 = scmp.eq.s32.totalorder %s28, 0
      %p126 = por %p124, %p125
      %p127 = scmp.ne.s32.totalorder %s116, %s119
      %p128 = scmp.eq.s32.totalorder %s33, 1
      %p129 = por %p127, %p128
      %p130 = scmp.ne.s32.totalorder %s119, %s120
      %p131 = scmp.eq.s32.totalorder %s33, 0
      %p132 = por %p130, %p131
      %p133 = scmp.ne.s32.totalorder %s119, %s120
      %p134 = scmp.eq.s32.totalorder %s34, 1
      %p135 = por %p133, %p134
      %p137 = scmp.ne.s32.totalorder %s120, %s136
      %p138 = scmp.eq.s32.totalorder %s34, 0
      %p139 = por %p137, %p138
      %s141 = sadd.s32 %s140, 1
      %p144 = scmp.eq.s32.totalorder %s28, 1
      %p145 = scmp.ne.s32.totalorder %s140, %s142
      %p146 = scmp.eq.s32.totalorder %s28, 0
      %p147 = por %p145, %p146
      %p148 = scmp.ne.s32.totalorder %s140, %s142
      %p149 = scmp.eq.s32.totalorder %s33, 1
      %p150 = por %p148, %p149
      %p151 = scmp.ne.s32.totalorder %s142, %s143
      %p152 = scmp.eq.s32.totalorder %s33, 0
      %p153 = por %p151, %p152
      %p154 = scmp.ne.s32.totalorder %s142, %s143
      %p155 = scmp.eq.s32.totalorder %s34, 1
      %p156 = por %p154, %p155
      %p158 = scmp.ne.s32.totalorder %s143, %s157
      %p159 = scmp.eq.s32.totalorder %s34, 0
      %p160 = por %p158, %p159
      %s162 = sadd.s32 %s161, 1
      %p165 = scmp.eq.s32.totalorder %s28, 1
      %p166 = scmp.ne.s32.totalorder %s161, %s163
      %p167 = scmp.eq.s32.totalorder %s28, 0
      %p168 = por %p166, %p167
      %p169 = scmp.ne.s32.totalorder %s161, %s163
      %p170 = scmp.eq.s32.totalorder %s33, 1
      %p171 = por %p169, %p170
      %p172 = scmp.ne.s32.totalorder %s163, %s164
      %p173 = scmp.eq.s32.totalorder %s33, 0
      %p174 = por %p172, %p173
      %p175 = scmp.ne.s32.totalorder %s163, %s164
      %p176 = scmp.eq.s32.totalorder %s34, 1
      %p177 = por %p175, %p176
      %p179 = scmp.ne.s32.totalorder %s164, %s178
      %p180 = scmp.eq.s32.totalorder %s34, 0
      %p181 = por %p179, %p180
      %s183 = sadd.s32 %s182, 1
      %p186 = scmp.eq.s32.totalorder %s28, 1
      %p187 = scmp.ne.s32.totalorder %s182, %s184
      %p188 = scmp.eq.s32.totalorder %s28, 0
      %p189 = por %p187, %p188
      %p190 = scmp.ne.s32.totalorder %s182, %s184
      %p191 = scmp.eq.s32.totalorder %s33, 1
      %p192 = por %p190, %p191
      %p193 = scmp.ne.s32.totalorder %s184, %s185
      %p194 = scmp.eq.s32.totalorder %s33, 0
      %p195 = por %p193, %p194
      %p196 = scmp.ne.s32.totalorder %s184, %s185
      %p197 = scmp.eq.s32.totalorder %s34, 1
      %p198 = por %p196, %p197
      %p200 = scmp.ne.s32.totalorder %s185, %s199
      %p201 = scmp.eq.s32.totalorder %s34, 0
      %p202 = por %p200, %p201
      %s204 = sadd.s32 %s203, 1
      %p207 = scmp.eq.s32.totalorder %s28, 1
      %p208 = scmp.ne.s32.totalorder %s203, %s205
      %p209 = scmp.eq.s32.totalorder %s28, 0
      %p210 = por %p208, %p209
      %p211 = scmp.ne.s32.totalorder %s203, %s205
      %p212 = scmp.eq.s32.totalorder %s33, 1
      %p213 = por %p211, %p212
      %p214 = scmp.ne.s32.totalorder %s205, %s206
      %p215 = scmp.eq.s32.totalorder %s33, 0
      %p216 = por %p214, %p215
      %p217 = scmp.ne.s32.totalorder %s205, %s206
      %p218 = scmp.eq.s32.totalorder %s34, 1
      %p219 = por %p217, %p218
      %p221 = scmp.ne.s32.totalorder %s206, %s220
      %p222 = scmp.eq.s32.totalorder %s34, 0
      %p223 = por %p221, %p222
      %s225 = sadd.s32 %s224, 1
      %p228 = scmp.eq.s32.totalorder %s28, 1
      %p229 = scmp.ne.s32.totalorder %s224, %s226
      %p230 = scmp.eq.s32.totalorder %s28, 0
      %p231 = por %p229, %p230
      %p232 = scmp.ne.s32.totalorder %s224, %s226
      %p233 = scmp.eq.s32.totalorder %s33, 1
      %p234 = por %p232, %p233
      %p235 = scmp.ne.s32.totalorder %s226, %s227
      %p236 = scmp.eq.s32.totalorder %s33, 0
      %p237 = por %p235, %p236
      %p238 = scmp.ne.s32.totalorder %s226, %s227
      %p239 = scmp.eq.s32.totalorder %s34, 1
      %p240 = por %p238, %p239
      %p242 = scmp.ne.s32.totalorder %s227, %s241
      %p243 = scmp.eq.s32.totalorder %s34, 0
      %p244 = por %p242, %p243
      %s246 = sadd.s32 %s245, 1
      %p249 = scmp.eq.s32.totalorder %s28, 1
      %p250 = scmp.ne.s32.totalorder %s245, %s247
      %p251 = scmp.eq.s32.totalorder %s28, 0
      %p252 = por %p250, %p251
      %p253 = scmp.ne.s32.totalorder %s245, %s247
      %p254 = scmp.eq.s32.totalorder %s33, 1
      %p255 = por %p253, %p254
      %p256 = scmp.ne.s32.totalorder %s247, %s248
      %p257 = scmp.eq.s32.totalorder %s33, 0
      %p258 = por %p256, %p257
      %p259 = scmp.ne.s32.totalorder %s247, %s248
      %p260 = scmp.eq.s32.totalorder %s34, 1
      %p261 = por %p259, %p260
      %p263 = scmp.ne.s32.totalorder %s248, %s262
      %p264 = scmp.eq.s32.totalorder %s34, 0
      %p265 = por %p263, %p264
      %s267 = sadd.s32 %s266, 1
      %p270 = scmp.eq.s32.totalorder %s28, 1
      %p271 = scmp.ne.s32.totalorder %s266, %s268
      %p272 = scmp.eq.s32.totalorder %s28, 0
      %p273 = por %p271, %p272
      %p274 = scmp.ne.s32.totalorder %s266, %s268
      %p275 = scmp.eq.s32.totalorder %s33, 1
      %p276 = por %p274, %p275
      %p277 = scmp.ne.s32.totalorder %s268, %s269
      %p278 = scmp.eq.s32.totalorder %s33, 0
      %p279 = por %p277, %p278
      %p280 = scmp.ne.s32.totalorder %s268, %s269
      %p281 = scmp.eq.s32.totalorder %s34, 1
      %p282 = por %p280, %p281
      %p284 = scmp.ne.s32.totalorder %s269, %s283
      %p285 = scmp.eq.s32.totalorder %s34, 0
      %p286 = por %p284, %p285
      %s287 = ssub.s32 %s28, %s35
      %p288 = scmp.eq.s32.totalorder %s287, 0
      %s290 = sadd.s32 %s289, 1
      %s291 = scalar_select %p288, %s289, %s290
      %p294 = pneg %p288
      %p295 = scmp.eq.s32.totalorder %s28, 1
      %p296 = por %p294, %p295
      %p297 = scmp.ne.s32.totalorder %s289, %s292
      %p298 = scmp.eq.s32.totalorder %s28, 0
      %p299 = por %p297, %p298
      %p300 = scmp.ne.s32.totalorder %s289, %s292
      %p301 = scmp.eq.s32.totalorder %s33, 1
      %p302 = por %p300, %p301
      %p303 = scmp.ne.s32.totalorder %s292, %s293
      %p304 = scmp.eq.s32.totalorder %s33, 0
      %p305 = por %p303, %p304
      %p306 = scmp.ne.s32.totalorder %s292, %s293
      %p307 = scmp.eq.s32.totalorder %s34, 1
      %p308 = por %p306, %p307
      %p310 = scmp.ne.s32.totalorder %s293, %s309
      %p311 = scmp.eq.s32.totalorder %s34, 0
      %p312 = por %p310, %p311
      %p313 = scmp.le.s32.totalorder 1, %s28
      %p314 = scmp.lt.s32.totalorder %s28, 3
      %p315 = pnand %p313, %p314
      %p316 = pneg %p315
      // Predicated region
      $region9: #{tpu_custom_call.1} parent=5 // pred_check
        _
      $region10: #{tpu_custom_call.1} parent=5 // pred_check_branch
        %318 = sbr.rel (%p315) target = $region12
      $region11: #{tpu_custom_call.1} parent=5 // pred_region
        %s319 = ssub.s32 %s28, 1
        // Predicated region
        $region13: #{tpu_custom_call.1} parent=11 // pred_check
          %p320 = pneg %p153
        $region14: #{tpu_custom_call.1} parent=11 // pred_check_branch
          %322 = sbr.rel (%p320) target = $region16
        $region15: #{tpu_custom_call.1} parent=11 // pred_region
          %s324 = ssub.s32 512, 512
          %325 = vsyncadd [#allocation6], %s324
          %s326 = sshll.u32 [#allocation7], 4
          %s327 = int_to_ptr.vmem [resolvable:$true] %s326
          %332 = dma.hbm_to_vmem [thread:$0]  %s4, 512, %s327, [#allocation6], 128, 128, 8
        $region16: #{tpu_custom_call.1} parent=11 // pred_fallthru
          _
        // Predicated region
        $region17: #{tpu_custom_call.1} parent=11 // pred_check
          %p333 = pneg %p174
        $region18: #{tpu_custom_call.1} parent=11 // pred_check_branch
          %335 = sbr.rel (%p333) target = $region20
        $region19: #{tpu_custom_call.1} parent=11 // pred_region
          %s337 = ssub.s32 256, 256
          %338 = vsyncadd [#allocation9], %s337
          %s339 = sshll.u32 [#allocation8], 4
          %s340 = int_to_ptr.vmem [resolvable:$true] %s339
          %345 = dma.hbm_to_vmem [thread:$0]  %s5, 256, %s340, [#allocation9], 64, 64, 4
        $region20: #{tpu_custom_call.1} parent=11 // pred_fallthru
          _
        // Predicated region
        $region21: #{tpu_custom_call.1} parent=11 // pred_check
          %p346 = pneg %p195
        $region22: #{tpu_custom_call.1} parent=11 // pred_check_branch
          %348 = sbr.rel (%p346) target = $region24
        $region23: #{tpu_custom_call.1} parent=11 // pred_region
          %s350 = ssub.s32 1536, 1536
          %351 = vsyncadd [#allocation9], %s350
          %s352 = sshll.u32 [#allocation10], 4
          %s353 = int_to_ptr.vmem [resolvable:$true] %s352
          %358 = dma.hbm_to_vmem [thread:$0]  %s6, 1536, %s353, [#allocation9], 64, 64, 4
        $region24: #{tpu_custom_call.1} parent=11 // pred_fallthru
          _
        // Predicated region
        $region25: #{tpu_custom_call.1} parent=11 // pred_check
          %p359 = pneg %p216
        $region26: #{tpu_custom_call.1} parent=11 // pred_check_branch
          %361 = sbr.rel (%p359) target = $region28
        $region27: #{tpu_custom_call.1} parent=11 // pred_region
          %s363 = ssub.s32 256, 256
          %364 = vsyncadd [#allocation12], %s363
          %s365 = sshll.u32 [#allocation11], 4
          %s366 = int_to_ptr.vmem [resolvable:$true] %s365
          %371 = dma.hbm_to_vmem [thread:$0]  %s7, 256, %s366, [#allocation12], 64, 64, 4
        $region28: #{tpu_custom_call.1} parent=11 // pred_fallthru
          _
        // Predicated region
        $region29: #{tpu_custom_call.1} parent=11 // pred_check
          %p372 = pneg %p237
        $region30: #{tpu_custom_call.1} parent=11 // pred_check_branch
          %374 = sbr.rel (%p372) target = $region32
        $region31: #{tpu_custom_call.1} parent=11 // pred_region
          _
        $region32: #{tpu_custom_call.1} parent=11 // pred_fallthru
          _
        // Predicated region
        $region33: #{tpu_custom_call.1} parent=11 // pred_check
          %p375 = pneg %p258
        $region34: #{tpu_custom_call.1} parent=11 // pred_check_branch
          %377 = sbr.rel (%p375) target = $region36
        $region35: #{tpu_custom_call.1} parent=11 // pred_region
          %s379 = ssub.s32 16, 16
          %380 = vsyncadd [#allocation12], %s379
          %s382 = sshll.u32 [#allocation13], 4
          %s383 = int_to_ptr.vmem [resolvable:$true] %s382
          %385 = dma.hbm_to_vmem [thread:$0]  %s9, 16, %s383, [#allocation12]
        $region36: #{tpu_custom_call.1} parent=11 // pred_fallthru
          _
        // Predicated region
        $region37: #{tpu_custom_call.1} parent=11 // pred_check
          %p386 = pneg %p279
        $region38: #{tpu_custom_call.1} parent=11 // pred_check_branch
          %388 = sbr.rel (%p386) target = $region40
        $region39: #{tpu_custom_call.1} parent=11 // pred_region
          _
        $region40: #{tpu_custom_call.1} parent=11 // pred_fallthru
          _
      $region12: #{tpu_custom_call.1} parent=5 // pred_fallthru
        _
      %p389 = scmp.lt.s32.totalorder %s28, 2
      // Predicated region
      $region41: #{tpu_custom_call.1} parent=5 // pred_check
        %p390 = pneg %p389
      $region42: #{tpu_custom_call.1} parent=5 // pred_check_branch
        %392 = sbr.rel (%p390) target = $region44
      $region43: #{tpu_custom_call.1} parent=5 // pred_region
        // Predicated region
        $region45: #{tpu_custom_call.1} parent=43 // pred_check
          %p393 = pneg %p48
        $region46: #{tpu_custom_call.1} parent=43 // pred_check_branch
          %395 = sbr.rel (%p393) target = $region48
        $region47: #{tpu_custom_call.1} parent=43 // pred_region
          %p396 = scmp.lt.s32.totalorder %s28, 1
          %s397 = scalar_select %p396, %s28, 1
          %s398 = smul.addr %s397, 8
          %s399 = scalar_lea.vmem %s0, %s398
        $region48: #{tpu_custom_call.1} parent=43 // pred_fallthru
          _
        // Predicated region
        $region49: #{tpu_custom_call.1} parent=43 // pred_check
          %p400 = pneg %p74
        $region50: #{tpu_custom_call.1} parent=43 // pred_check_branch
          %402 = sbr.rel (%p400) target = $region52
        $region51: #{tpu_custom_call.1} parent=43 // pred_region
          %p403 = scmp.lt.s32.totalorder %s28, 1
          %s404 = scalar_select %p403, %s28, 1
          %s405 = smul.addr %s404, 2
          %s406 = smul.addr %s405, 8
          %s407 = scalar_lea.vmem %s1, %s406
        $region52: #{tpu_custom_call.1} parent=43 // pred_fallthru
          _
        // Predicated region
        $region53: #{tpu_custom_call.1} parent=43 // pred_check
          %p408 = pneg %p100
        $region54: #{tpu_custom_call.1} parent=43 // pred_check_branch
          %410 = sbr.rel (%p408) target = $region56
        $region55: #{tpu_custom_call.1} parent=43 // pred_region
          %s411 = sand.u32 %s90, 1
          %s412 = scalar_lea.sflag [#allocation3], %s411
          %s413 = sand.u32 %s90, 1
          %s414 = smul.addr %s413, 8
          %s415 = scalar_lea.vmem [#allocation2], %s414
          %s417 = ssub.s32 128, 128
          %418 = vsyncadd %s412, %s417
          %s419 = smul.addr %s28, 128
          %s420 = scalar_lea.hbm %s2, %s419
          %s422 = sshll.u32 %s415, 4
          %s423 = int_to_ptr.vmem [resolvable:$true] %s422
          %425 = dma.hbm_to_vmem [thread:$0]  %s420, 128, %s423, %s412
        $region56: #{tpu_custom_call.1} parent=43 // pred_fallthru
          _
        // Predicated region
        $region57: #{tpu_custom_call.1} parent=43 // pred_check
          %p426 = pneg %p126
        $region58: #{tpu_custom_call.1} parent=43 // pred_check_branch
          %428 = sbr.rel (%p426) target = $region60
        $region59: #{tpu_custom_call.1} parent=43 // pred_region
          %s429 = sand.u32 %s28, 1
          %s430 = scalar_lea.sflag [#allocation6], %s429
          %s431 = sand.u32 %s116, 1
          %s432 = smul.addr %s431, 16
          %s433 = scalar_lea.vmem [#allocation5], %s432
          %s435 = ssub.s32 256, 256
          %436 = vsyncadd %s430, %s435
          %s437 = smul.addr %s28, 2
          %s438 = smul.addr %s437, 128
          %s439 = scalar_lea.hbm %s3, %s438
          %s440 = sshll.u32 %s433, 4
          %s441 = int_to_ptr.vmem [resolvable:$true] %s440
          %446 = dma.hbm_to_vmem [thread:$0]  %s439, 256, %s441, %s430, 128, 128, 8
        $region60: #{tpu_custom_call.1} parent=43 // pred_fallthru
          _
      $region44: #{tpu_custom_call.1} parent=5 // pred_fallthru
        _
      %p447 = scmp.le.s32.totalorder 1, %s28
      %p448 = scmp.lt.s32.totalorder %s28, 3
      %p449 = pnand %p447, %p448
      %p450 = pneg %p449
      // Predicated region
      $region61: #{tpu_custom_call.1} parent=5 // pred_check
        _
      $region62: #{tpu_custom_call.1} parent=5 // pred_check_branch
        %452 = sbr.rel (%p449) target = $region64
      $region63: #{tpu_custom_call.1} parent=5 // pred_region
        %s453 = ssub.s32 %s28, 1
        %s454 = sand.u32 %s93, 1
        %s455 = scalar_lea.sflag [#allocation3], %s454
        %s456 = sand.u32 %s93, 1
        %s457 = smul.addr %s456, 8
        %s458 = scalar_lea.vmem [#allocation2], %s457
        // Predicated region
        $region65: #{tpu_custom_call.1} parent=63 // pred_check
          %p459 = pneg %p106
        $region66: #{tpu_custom_call.1} parent=63 // pred_check_branch
          %461 = sbr.rel (%p459) target = $region68
        $region67: #{tpu_custom_call.1} parent=63 // pred_region
          %462 = dma.done %s455, 128
        $region68: #{tpu_custom_call.1} parent=63 // pred_fallthru
          _
        %s463 = sand.u32 %s33, 1
        %s464 = scalar_lea.sflag [#allocation6], %s463
        %s465 = sand.u32 %s119, 1
        %s466 = smul.addr %s465, 16
        %s467 = scalar_lea.vmem [#allocation5], %s466
        // Predicated region
        $region69: #{tpu_custom_call.1} parent=63 // pred_check
          %p468 = pneg %p132
        $region70: #{tpu_custom_call.1} parent=63 // pred_check_branch
          %470 = sbr.rel (%p468) target = $region72
        $region71: #{tpu_custom_call.1} parent=63 // pred_region
          %471 = dma.done %s464, 256
        $region72: #{tpu_custom_call.1} parent=63 // pred_fallthru
          _
        // Predicated region
        $region73: #{tpu_custom_call.1} parent=63 // pred_check
          %p472 = pneg %p153
        $region74: #{tpu_custom_call.1} parent=63 // pred_check_branch
          %474 = sbr.rel (%p472) target = $region76
        $region75: #{tpu_custom_call.1} parent=63 // pred_region
          %475 = dma.done [#allocation6], 512
        $region76: #{tpu_custom_call.1} parent=63 // pred_fallthru
          _
        // Predicated region
        $region77: #{tpu_custom_call.1} parent=63 // pred_check
          %p476 = pneg %p174
        $region78: #{tpu_custom_call.1} parent=63 // pred_check_branch
          %478 = sbr.rel (%p476) target = $region80
        $region79: #{tpu_custom_call.1} parent=63 // pred_region
          %479 = dma.done [#allocation9], 256
        $region80: #{tpu_custom_call.1} parent=63 // pred_fallthru
          _
        // Predicated region
        $region81: #{tpu_custom_call.1} parent=63 // pred_check
          %p480 = pneg %p195
        $region82: #{tpu_custom_call.1} parent=63 // pred_check_branch
          %482 = sbr.rel (%p480) target = $region84
        $region83: #{tpu_custom_call.1} parent=63 // pred_region
          %483 = dma.done [#allocation9], 1536
        $region84: #{tpu_custom_call.1} parent=63 // pred_fallthru
          _
        // Predicated region
        $region85: #{tpu_custom_call.1} parent=63 // pred_check
          %p484 = pneg %p216
        $region86: #{tpu_custom_call.1} parent=63 // pred_check_branch
          %486 = sbr.rel (%p484) target = $region88
        $region87: #{tpu_custom_call.1} parent=63 // pred_region
          %487 = dma.done [#allocation12], 256
        $region88: #{tpu_custom_call.1} parent=63 // pred_fallthru
          _
        // Predicated region
        $region89: #{tpu_custom_call.1} parent=63 // pred_check
          %p488 = pneg %p258
        $region90: #{tpu_custom_call.1} parent=63 // pred_check_branch
          %490 = sbr.rel (%p488) target = $region92
        $region91: #{tpu_custom_call.1} parent=63 // pred_region
          %491 = dma.done [#allocation12], 16
        $region92: #{tpu_custom_call.1} parent=63 // pred_fallthru
          _
        %p492 = scmp.lt.s32.totalorder %s33, 1
        %s493 = scalar_select %p492, %s33, 1
        %s494 = smul.addr %s493, 8
        %s495 = scalar_lea.vmem %s0, %s494
        %p496 = pneg %p54
        %p497 = pneg %p51
        %p498 = scmp.lt.s32.totalorder %s33, 1
        %s499 = scalar_select %p498, %s33, 1
        %s500 = smul.addr %s499, 2
        %s501 = smul.addr %s500, 8
        %s502 = scalar_lea.vmem %s1, %s501
        %p503 = pneg %p80
        %p504 = pneg %p77
        %s505 = sand.u32 %s93, 1
        %s506 = scalar_lea.sflag [#allocation3], %s505
        %s507 = sand.u32 %s93, 1
        %s508 = smul.addr %s507, 8
        %s509 = scalar_lea.vmem [#allocation2], %s508
        %p510 = pneg %p106
        %p511 = pneg %p103
        %s512 = sand.u32 %s33, 1
        %s513 = scalar_lea.sflag [#allocation6], %s512
        %s514 = sand.u32 %s119, 1
        %s515 = smul.addr %s514, 16
        %s516 = scalar_lea.vmem [#allocation5], %s515
        %p517 = pneg %p132
        %p518 = pneg %p129
        %p519 = pneg %p153
        %p520 = pneg %p150
        %p521 = pneg %p174
        %p522 = pneg %p171
        %p523 = pneg %p195
        %p524 = pneg %p192
        %p525 = pneg %p216
        %p526 = pneg %p213
        %p527 = pneg %p237
        %p528 = pneg %p234
        %p529 = pneg %p258
        %p530 = pneg %p255
        %p531 = pneg %p279
        %p532 = pneg %p276
        %p533 = pneg %p305
        %p534 = pneg %p302
        %s535 = sand.u32 %s292, 1
        %s536 = scalar_lea.sflag [#allocation4], %s535
        %s537 = sand.u32 %s292, 1
        %s538 = smul.addr %s537, 2
        %s539 = scalar_lea.vmem [#allocation14], %s538
        %p540 = scmp.lt.s32.totalorder %s33, 1
        %s541 = scalar_select %p540, %s33, 1
        %s542 = smul.addr %s541, 8
        %s543 = scalar_lea.vmem %s0, %s542
        %p544 = scmp.lt.s32.totalorder %s33, 1
        %s545 = scalar_select %p544, %s33, 1
        %s546 = smul.addr %s545, 2
        %s547 = smul.addr %s546, 8
        %s548 = scalar_lea.vmem %s1, %s547
        %v550 = vld [vmem:[%s10] sm:$0xff]
        %v551 = vld [vmem:[%s10 + $0x8] sm:$0xff]
        %v552 = vld [vmem:[#allocation7] sm:$0xff]
        %v553 = vld [vmem:[#allocation7 + $0x8] sm:$0xff]
        %v554 = vld [vmem:[#allocation7 + $0x10] sm:$0xff]
        %v555 = vld [vmem:[#allocation7 + $0x18] sm:$0xff]
        %v556 = vmul.f32 %v552, 0.35355338
        %v557 = vmul.f32 %v553, 0.35355338
        %v558 = vmul.f32 %v554, 0.35355338
        %v559 = vmul.f32 %v555, 0.35355338
        %v560 = vld [vmem:[%s543] sm:$0xff]
        %v561 = vld [vmem:[%s548] sm:$0xff]
        %v562 = vld [vmem:[%s548 + $0x8] sm:$0xff]
        %v563 = vld [vmem:[%s458] sm:$0xff]
        %v564 = vld [vmem:[%s467] sm:$0xff]
        %v565 = vld [vmem:[%s467 + $0x8] sm:$0xff]
        %v566 = vadd.f32 %v560, %v563
        %v567 = vld [vmem:[#allocation8] sm:$0xf]
        %v568 = vld [vmem:[#allocation8 + $0x4] sm:$0xf]
        %v569 = vld [vmem:[#allocation8 + $0x8] sm:$0xf]
        %v570 = vld [vmem:[#allocation8 + $0xc] sm:$0xf]
        %v571 = vpack.c.bf16 %v566, %v566
        %v576 = vunpack.c.l.b16 %v567
        %v577 = vunpack.c.l.b16 %v568
        %v578 = vunpack.c.l.b16 %v569
        %v579 = vunpack.c.l.b16 %v570
        %v580 = vpack.c.b16 %v577, %v576
        %v581 = vpack.c.b16 %v579, %v578
        %vm584 = vcmask 261120
        %v586 = vsel %vm584, %v571, 0
        %588 = vmatprep.subr.bf16.mxu0 0
        %589 = vmatpush1.bf16.msra.mxu0 0
        %590 = vmatprep.subr.bf16.mxu0 0
        %591 = vmatpush1.bf16.msra.mxu0 0
        %592 = vmatprep.subr.bf16.mxu0 0
        %593 = vmatpush1.bf16.msra.mxu0 0
        %594 = vmatprep.subr.bf16.mxu0 0
        %595 = vmatpush1.bf16.msra.mxu0 0
        %596 = vmatprep.subr.bf16.mxu0 0
        %597 = vmatpush1.bf16.msra.mxu0 0
        %598 = vmatprep.subr.bf16.mxu0 0
        %599 = vmatpush1.bf16.msra.mxu0 0
        %600 = vmatprep.subr.bf16.mxu0 0
        %601 = vmatpush1.bf16.msra.mxu0 %v581
        %602 = vmatprep.subr.bf16.mxu0 0
        %603 = vmatpush1.bf16.msra.mxu0 %v580
        %604 = vmatprep.subr.bf16.mxu0 0
        %605 = vmatpush2.bf16.msra.mxu0 0
        %606 = vmatprep.subr.bf16.mxu0 0
        %607 = vmatpush2.bf16.msra.mxu0 0
        %608 = vmatprep.subr.bf16.mxu0 0
        %609 = vmatpush2.bf16.msra.mxu0 0
        %610 = vmatprep.subr.bf16.mxu0 0
        %611 = vmatpush2.bf16.msra.mxu0 0
        %612 = vmatprep.subr.bf16.mxu0 0
        %613 = vmatpush2.bf16.msra.mxu0 0
        %614 = vmatprep.subr.bf16.mxu0 0
        %615 = vmatpush2.bf16.msra.mxu0 0
        %616 = vmatprep.subr.bf16.mxu0 0
        %617 = vmatpush2.bf16.msra.mxu0 0
        %618 = vmatprep.subr.bf16.mxu0 0
        %619 = vmatpush2.bf16.msra.mxu0 0
        %620 = vmatprep.mubr.bf16.mxu0 0
        %621 = vmatmul.mubr.bf16.gmra.mxu0 %v586
        %v622 = vpop.f32.mrf.mxu0
        %v623 = vadd.f32 0.0, %v622
        %v624 = vpop.f32.mrf.mxu0
        %v625 = vpop.f32.mrf.mxu0
        %v626 = vpop.f32.mrf.mxu0
        %627 = vdwg.mxu0
        %v628 = vlaneseq
        %v629 = vshrl.u32 %v628, 7
        %v630 = vsub.s32 0, %v629
        %v631 = vrot.slane %v550, %v630
        %v632 = vadd.f32 %v623, %v631
        %v633 = vlaneseq
        %v634 = vshrl.u32 %v633, 7
        %v635 = vsub.s32 1, %v634
        %v636 = vrot.slane %v550, %v635
        %638 = vrot.lane.b32.xlu0 %v636, 32
        %v639 = vpop.permute.xlu0 %638
        %v641 = vadd.f32 %v623, %v639
        %v642 = vld [vmem:[#allocation10] sm:$0xf]
        %v643 = vld [vmem:[#allocation10 + $0x4] sm:$0xf]
        %v644 = vld [vmem:[#allocation10 + $0x8] sm:$0xf]
        %v645 = vld [vmem:[#allocation10 + $0xc] sm:$0xf]
        %v646 = vpack.c.bf16 %v560, %v560
        %v647 = vlaneseq
        %v648 = vshrl.u32 %v647, 7
        %v649 = vsub.s32 2, %v648
        %v650 = vrot.slane %v550, %v649
        %v655 = vunpack.c.l.b16 %v642
        %v656 = vunpack.c.l.b16 %v643
        %v657 = vunpack.c.l.b16 %v644
        %v658 = vunpack.c.l.b16 %v645
        %v659 = vpack.c.b16 %v656, %v655
        %v660 = vpack.c.b16 %v658, %v657
        %v664 = vsel %vm584, %v646, 0
        %666 = vmatprep.subr.bf16.mxu0 0
        %667 = vmatpush1.bf16.msra.mxu0 0
        %668 = vmatprep.subr.bf16.mxu0 0
        %669 = vmatpush1.bf16.msra.mxu0 0
        %670 = vmatprep.subr.bf16.mxu0 0
        %671 = vmatpush1.bf16.msra.mxu0 0
        %672 = vmatprep.subr.bf16.mxu0 0
        %673 = vmatpush1.bf16.msra.mxu0 0
        %674 = vmatprep.subr.bf16.mxu0 0
        %675 = vmatpush1.bf16.msra.mxu0 0
        %676 = vmatprep.subr.bf16.mxu0 0
        %677 = vmatpush1.bf16.msra.mxu0 0
        %678 = vmatprep.subr.bf16.mxu0 0
        %679 = vmatpush1.bf16.msra.mxu0 %v660
        %680 = vmatprep.subr.bf16.mxu0 0
        %681 = vmatpush1.bf16.msra.mxu0 %v659
        %682 = vmatprep.subr.bf16.mxu0 0
        %683 = vmatpush2.bf16.msra.mxu0 0
        %684 = vmatprep.subr.bf16.mxu0 0
        %685 = vmatpush2.bf16.msra.mxu0 0
        %686 = vmatprep.subr.bf16.mxu0 0
        %687 = vmatpush2.bf16.msra.mxu0 0
        %688 = vmatprep.subr.bf16.mxu0 0
        %689 = vmatpush2.bf16.msra.mxu0 0
        %690 = vmatprep.subr.bf16.mxu0 0
        %691 = vmatpush2.bf16.msra.mxu0 0
        %692 = vmatprep.subr.bf16.mxu0 0
        %693 = vmatpush2.bf16.msra.mxu0 0
        %694 = vmatprep.subr.bf16.mxu0 0
        %695 = vmatpush2.bf16.msra.mxu0 0
        %696 = vmatprep.subr.bf16.mxu0 0
        %697 = vmatpush2.bf16.msra.mxu0 0
        %698 = vmatprep.mubr.bf16.mxu0 0
        %699 = vmatmul.mubr.bf16.gmra.mxu0 %v664
        %v700 = vpop.f32.mrf.mxu0
        %v701 = vadd.f32 %v650, %v700
        %v702 = vpop.f32.mrf.mxu0
        %v703 = vpop.f32.mrf.mxu0
        %v704 = vpop.f32.mrf.mxu0
        %705 = vdwg.mxu0
        %s706 = scalar_lea.vmem [#allocation10], 16
        %v707 = vld [vmem:[%s706] sm:$0xf]
        %v708 = vld [vmem:[%s706 + $0x4] sm:$0xf]
        %v709 = vld [vmem:[%s706 + $0x8] sm:$0xf]
        %v710 = vld [vmem:[%s706 + $0xc] sm:$0xf]
        %v711 = vpack.c.bf16 %v641, %v641
        %v712 = vpack.c.bf16 %v701, %v701
        %v713 = vmul.f32 %v632, %v556
        %v714 = vmul.f32 %v632, %v557
        %v715 = vmul.f32 %v632, %v558
        %v716 = vmul.f32 %v632, %v559
        %v717 = vpack.c.bf16 %v714, %v713
        %v718 = vpack.c.bf16 %v716, %v715
        %720 = vrot.lane.b32.xlu0 %v711, 96
        %v721 = vpop.permute.xlu0 %720
        %v723 = vsel %vm584, %v717, 0
        %v726 = vsel %vm584, %v718, 0
        %v729 = vsel %vm584, %v721, 0
        %731 = vmatprep.subr.bf16.mxu0 0
        %732 = vmatpush1.bf16.xpose.msra.mxu0 0
        %733 = vmatprep.subr.bf16.mxu0 0
        %734 = vmatpush1.bf16.xpose.msra.mxu0 0
        %735 = vmatprep.subr.bf16.mxu0 0
        %736 = vmatpush1.bf16.xpose.msra.mxu0 0
        %737 = vmatprep.subr.bf16.mxu0 0
        %738 = vmatpush1.bf16.xpose.msra.mxu0 0
        %739 = vmatprep.subr.bf16.mxu0 0
        %740 = vmatpush1.bf16.xpose.msra.mxu0 0
        %741 = vmatprep.subr.bf16.mxu0 0
        %742 = vmatpush1.bf16.xpose.msra.mxu0 0
        %743 = vmatprep.subr.bf16.mxu0 0
        %744 = vmatpush1.bf16.xpose.msra.mxu0 0
        %745 = vmatprep.subr.bf16.mxu0 0
        %746 = vmatpush1.bf16.xpose.msra.mxu0 %v729
        %747 = vmatprep.subr.bf16.mxu0 0
        %748 = vmatpush2.bf16.xpose.msra.mxu0 0
        %749 = vmatprep.subr.bf16.mxu0 0
        %750 = vmatpush2.bf16.xpose.msra.mxu0 0
        %751 = vmatprep.subr.bf16.mxu0 0
        %752 = vmatpush2.bf16.xpose.msra.mxu0 0
        %753 = vmatprep.subr.bf16.mxu0 0
        %754 = vmatpush2.bf16.xpose.msra.mxu0 0
        %755 = vmatprep.subr.bf16.mxu0 0
        %756 = vmatpush2.bf16.xpose.msra.mxu0 0
        %757 = vmatprep.subr.bf16.mxu0 0
        %758 = vmatpush2.bf16.xpose.msra.mxu0 0
        %759 = vmatprep.subr.bf16.mxu0 0
        %760 = vmatpush2.bf16.xpose.msra.mxu0 0
        %761 = vmatprep.subr.bf16.mxu0 0
        %762 = vmatpush2.bf16.xpose.msra.mxu0 0
        %763 = vmatprep.mubr.bf16.mxu0 0
        %764 = vmatmul.mubr.bf16.gmra.mxu0 %v723
        %v765 = vpop.f32.mrf.mxu0
        %v766 = vadd.f32 0.0, %v765
        %v767 = vpop.f32.mrf.mxu0
        %v768 = vpop.f32.mrf.mxu0
        %v769 = vadd.f32 0.0, %v768
        %v770 = vpop.f32.mrf.mxu0
        %771 = vmatprep.mubr.bf16.mxu0 0
        %772 = vmatmul.mubr.bf16.gmra.mxu0 %v726
        %v773 = vpop.f32.mrf.mxu0
        %v774 = vadd.f32 0.0, %v773
        %v775 = vpop.f32.mrf.mxu0
        %v776 = vpop.f32.mrf.mxu0
        %v777 = vadd.f32 0.0, %v776
        %v778 = vpop.f32.mrf.mxu0
        %779 = vdwg.mxu0
        %vm780 = vcmask 64512
        %v781 = vsel %vm780, %v766, -inf
        %782 = vmax.xlane.f32.xlu0 %v781
        %v783 = vpop.xlane.xlu0 %782
        %v784 = vsel %vm780, %v769, -inf
        %785 = vmax.xlane.f32.xlu0 %v784
        %v786 = vpop.xlane.xlu0 %785
        %v787 = vsel %vm780, %v774, -inf
        %788 = vmax.xlane.f32.xlu0 %v787
        %v789 = vpop.xlane.xlu0 %788
        %v790 = vsel %vm780, %v777, -inf
        %791 = vmax.xlane.f32.xlu0 %v790
        %v792 = vpop.xlane.xlu0 %791
        %v793 = vsub.f32 %v766, %v783
        %v794 = vsub.f32 %v769, %v786
        %v795 = vsub.f32 %v774, %v789
        %v796 = vsub.f32 %v777, %v792
        %v797 = vmul.f32 %v793, 1.442695
        %v798 = vpow.pop %v797
        %v799 = vmul.f32 %v794, 1.442695
        %v800 = vpow.pop %v799
        %v801 = vmul.f32 %v795, 1.442695
        %v802 = vpow.pop %v801
        %v803 = vmul.f32 %v796, 1.442695
        %v804 = vpow.pop %v803
        %v805 = vsel %vm780, %v798, 0.0
        %806 = vadd.xlane.f32.xlu0 %v805
        %v807 = vpop.xlane.xlu0 %806
        %v808 = vsel %vm780, %v800, 0.0
        %809 = vadd.xlane.f32.xlu0 %v808
        %v810 = vpop.xlane.xlu0 %809
        %v811 = vsel %vm780, %v802, 0.0
        %812 = vadd.xlane.f32.xlu0 %v811
        %v813 = vpop.xlane.xlu0 %812
        %v814 = vsel %vm780, %v804, 0.0
        %815 = vadd.xlane.f32.xlu0 %v814
        %v816 = vpop.xlane.xlu0 %815
        %v817 = vrcp.pop %v807
        %v818 = vrcp.pop %v810
        %v819 = vrcp.pop %v813
        %v820 = vrcp.pop %v816
        %v821 = vmul.f32 %v798, %v817
        %v822 = vmul.f32 %v800, %v818
        %v823 = vmul.f32 %v802, %v819
        %v824 = vmul.f32 %v804, %v820
        %v825 = vpack.c.bf16 %v822, %v821
        %v826 = vpack.c.bf16 %v824, %v823
        %v828 = vsel %vm780, %v825, 0
        %v831 = vsel %vm780, %v826, 0
        %vm833 = vcmask 1043456
        %v835 = vsel %vm833, %v712, 0
        %837 = vmatprep.subr.bf16.mxu0 0
        %838 = vmatpush1.bf16.msra.mxu0 0
        %839 = vmatprep.subr.bf16.mxu0 0
        %840 = vmatpush1.bf16.msra.mxu0 0
        %841 = vmatprep.subr.bf16.mxu0 0
        %842 = vmatpush1.bf16.msra.mxu0 0
        %843 = vmatprep.subr.bf16.mxu0 0
        %844 = vmatpush1.bf16.msra.mxu0 0
        %845 = vmatprep.subr.bf16.mxu0 0
        %846 = vmatpush1.bf16.msra.mxu0 0
        %847 = vmatprep.subr.bf16.mxu0 0
        %848 = vmatpush1.bf16.msra.mxu0 0
        %849 = vmatprep.subr.bf16.mxu0 0
        %850 = vmatpush1.bf16.msra.mxu0 0
        %851 = vmatprep.subr.bf16.mxu0 0
        %852 = vmatpush1.bf16.msra.mxu0 %v835
        %853 = vmatprep.subr.bf16.mxu0 0
        %854 = vmatpush2.bf16.msra.mxu0 0
        %855 = vmatprep.subr.bf16.mxu0 0
        %856 = vmatpush2.bf16.msra.mxu0 0
        %857 = vmatprep.subr.bf16.mxu0 0
        %858 = vmatpush2.bf16.msra.mxu0 0
        %859 = vmatprep.subr.bf16.mxu0 0
        %860 = vmatpush2.bf16.msra.mxu0 0
        %861 = vmatprep.subr.bf16.mxu0 0
        %862 = vmatpush2.bf16.msra.mxu0 0
        %863 = vmatprep.subr.bf16.mxu0 0
        %864 = vmatpush2.bf16.msra.mxu0 0
        %865 = vmatprep.subr.bf16.mxu0 0
        %866 = vmatpush2.bf16.msra.mxu0 0
        %867 = vmatprep.subr.bf16.mxu0 0
        %868 = vmatpush2.bf16.msra.mxu0 0
        %869 = vmatprep.mubr.bf16.mxu0 0
        %870 = vmatmul.mubr.bf16.gmra.mxu0 %v828
        %v871 = vpop.f32.mrf.mxu0
        %v872 = vadd.f32 0.0, %v871
        %v873 = vpop.f32.mrf.mxu0
        %v874 = vpop.f32.mrf.mxu0
        %v875 = vadd.f32 0.0, %v874
        %v876 = vpop.f32.mrf.mxu0
        %877 = vmatprep.mubr.bf16.mxu0 0
        %878 = vmatmul.mubr.bf16.gmra.mxu0 %v831
        %v879 = vpop.f32.mrf.mxu0
        %v880 = vadd.f32 0.0, %v879
        %v881 = vpop.f32.mrf.mxu0
        %v882 = vpop.f32.mrf.mxu0
        %v883 = vadd.f32 0.0, %v882
        %v884 = vpop.f32.mrf.mxu0
        %885 = vdwg.mxu0
        %v886 = vmul.f32 %v872, %v552
        %v887 = vmul.f32 %v875, %v553
        %v888 = vmul.f32 %v880, %v554
        %v889 = vmul.f32 %v883, %v555
        %v890 = vsel %vm584, %v886, 0.0
        %v891 = vsel %vm584, %v887, 0.0
        %v892 = vadd.f32 %v890, %v891
        %v893 = vsel %vm584, %v888, 0.0
        %v894 = vadd.f32 %v892, %v893
        %v895 = vsel %vm584, %v889, 0.0
        %v896 = vadd.f32 %v894, %v895
        %v897 = vpack.c.bf16 %v896, %v896
        %v898 = vlaneseq
        %v899 = vshrl.u32 %v898, 7
        %v900 = vsub.s32 3, %v899
        %v901 = vrot.slane %v550, %v900
        %v906 = vunpack.c.l.b16 %v707
        %v907 = vunpack.c.l.b16 %v708
        %v908 = vunpack.c.l.b16 %v709
        %v909 = vunpack.c.l.b16 %v710
        %v910 = vpack.c.b16 %v907, %v906
        %v911 = vpack.c.b16 %v909, %v908
        %v915 = vsel %vm584, %v897, 0
        %917 = vmatprep.subr.bf16.mxu0 0
        %918 = vmatpush1.bf16.msra.mxu0 0
        %919 = vmatprep.subr.bf16.mxu0 0
        %920 = vmatpush1.bf16.msra.mxu0 0
        %921 = vmatprep.subr.bf16.mxu0 0
        %922 = vmatpush1.bf16.msra.mxu0 0
        %923 = vmatprep.subr.bf16.mxu0 0
        %924 = vmatpush1.bf16.msra.mxu0 0
        %925 = vmatprep.subr.bf16.mxu0 0
        %926 = vmatpush1.bf16.msra.mxu0 0
        %927 = vmatprep.subr.bf16.mxu0 0
        %928 = vmatpush1.bf16.msra.mxu0 0
        %929 = vmatprep.subr.bf16.mxu0 0
        %930 = vmatpush1.bf16.msra.mxu0 %v911
        %931 = vmatprep.subr.bf16.mxu0 0
        %932 = vmatpush1.bf16.msra.mxu0 %v910
        %933 = vmatprep.subr.bf16.mxu0 0
        %934 = vmatpush2.bf16.msra.mxu0 0
        %935 = vmatprep.subr.bf16.mxu0 0
        %936 = vmatpush2.bf16.msra.mxu0 0
        %937 = vmatprep.subr.bf16.mxu0 0
        %938 = vmatpush2.bf16.msra.mxu0 0
        %939 = vmatprep.subr.bf16.mxu0 0
        %940 = vmatpush2.bf16.msra.mxu0 0
        %941 = vmatprep.subr.bf16.mxu0 0
        %942 = vmatpush2.bf16.msra.mxu0 0
        %943 = vmatprep.subr.bf16.mxu0 0
        %944 = vmatpush2.bf16.msra.mxu0 0
        %945 = vmatprep.subr.bf16.mxu0 0
        %946 = vmatpush2.bf16.msra.mxu0 0
        %947 = vmatprep.subr.bf16.mxu0 0
        %948 = vmatpush2.bf16.msra.mxu0 0
        %949 = vmatprep.mubr.bf16.mxu0 0
        %950 = vmatmul.mubr.bf16.gmra.mxu0 %v915
        %v951 = vpop.f32.mrf.mxu0
        %v952 = vadd.f32 %v901, %v951
        %v953 = vpop.f32.mrf.mxu0
        %v954 = vpop.f32.mrf.mxu0
        %v955 = vpop.f32.mrf.mxu0
        %956 = vdwg.mxu0
        %v957 = vadd.f32 %v560, %v952
        %v958 = vsel %vm584, %v957, 0.0
        %959 = vadd.xlane.f32.xlu0 %v958
        %v960 = vpop.xlane.xlu0 %959
        %v961 = vrcp.pop 32.0
        %v962 = vmul.f32 %v960, %v961
        %v963 = vsub.f32 %v957, %v962
        %v964 = vmul.f32 %v963, %v963
        %v965 = vsel %vm584, %v964, 0.0
        %966 = vadd.xlane.f32.xlu0 %v965
        %v967 = vpop.xlane.xlu0 %966
        %v968 = vmul.f32 %v967, %v961
        %v969 = vadd.f32 %v968, 1e-05
        %v970 = vrsqrt.pop %v969
        %v971 = vmul.f32 %v963, %v970
        %v972 = vlaneseq
        %v973 = vshrl.u32 %v972, 7
        %v974 = vsub.s32 1, %v973
        %v975 = vrot.slane %v551, %v974
        %v976 = vmul.f32 %v971, %v975
        %v977 = vlaneseq
        %v978 = vshrl.u32 %v977, 7
        %v979 = vsub.s32 2, %v978
        %v980 = vrot.slane %v551, %v979
        %v981 = vadd.f32 %v976, %v980
        %v982 = vadd.f32 %v981, %v563
        %s983 = scalar_lea.vmem [#allocation10], 32
        %v984 = vld [vmem:[%s983] sm:$0xf]
        %v985 = vld [vmem:[%s983 + $0x4] sm:$0xf]
        %v986 = vld [vmem:[%s983 + $0x8] sm:$0xf]
        %v987 = vld [vmem:[%s983 + $0xc] sm:$0xf]
        %v988 = vpack.c.bf16 %v982, %v982
        %v989 = vlaneseq
        %v990 = vshrl.u32 %v989, 7
        %v991 = vsub.s32 4, %v990
        %v992 = vrot.slane %v550, %v991
        %v997 = vunpack.c.l.b16 %v984
        %v998 = vunpack.c.l.b16 %v985
        %v999 = vunpack.c.l.b16 %v986
        %v1000 = vunpack.c.l.b16 %v987
        %v1001 = vpack.c.b16 %v998, %v997
        %v1002 = vpack.c.b16 %v1000, %v999
        %v1006 = vsel %vm584, %v988, 0
        %1008 = vmatprep.subr.bf16.mxu0 0
        %1009 = vmatpush1.bf16.msra.mxu0 0
        %1010 = vmatprep.subr.bf16.mxu0 0
        %1011 = vmatpush1.bf16.msra.mxu0 0
        %1012 = vmatprep.subr.bf16.mxu0 0
        %1013 = vmatpush1.bf16.msra.mxu0 0
        %1014 = vmatprep.subr.bf16.mxu0 0
        %1015 = vmatpush1.bf16.msra.mxu0 0
        %1016 = vmatprep.subr.bf16.mxu0 0
        %1017 = vmatpush1.bf16.msra.mxu0 0
        %1018 = vmatprep.subr.bf16.mxu0 0
        %1019 = vmatpush1.bf16.msra.mxu0 0
        %1020 = vmatprep.subr.bf16.mxu0 0
        %1021 = vmatpush1.bf16.msra.mxu0 %v1002
        %1022 = vmatprep.subr.bf16.mxu0 0
        %1023 = vmatpush1.bf16.msra.mxu0 %v1001
        %1024 = vmatprep.subr.bf16.mxu0 0
        %1025 = vmatpush2.bf16.msra.mxu0 0
        %1026 = vmatprep.subr.bf16.mxu0 0
        %1027 = vmatpush2.bf16.msra.mxu0 0
        %1028 = vmatprep.subr.bf16.mxu0 0
        %1029 = vmatpush2.bf16.msra.mxu0 0
        %1030 = vmatprep.subr.bf16.mxu0 0
        %1031 = vmatpush2.bf16.msra.mxu0 0
        %1032 = vmatprep.subr.bf16.mxu0 0
        %1033 = vmatpush2.bf16.msra.mxu0 0
        %1034 = vmatprep.subr.bf16.mxu0 0
        %1035 = vmatpush2.bf16.msra.mxu0 0
        %1036 = vmatprep.subr.bf16.mxu0 0
        %1037 = vmatpush2.bf16.msra.mxu0 0
        %1038 = vmatprep.subr.bf16.mxu0 0
        %1039 = vmatpush2.bf16.msra.mxu0 0
        %1040 = vmatprep.mubr.bf16.mxu0 0
        %1041 = vmatmul.mubr.bf16.gmra.mxu0 %v1006
        %v1042 = vpop.f32.mrf.mxu0
        %v1043 = vadd.f32 %v992, %v1042
        %v1044 = vpop.f32.mrf.mxu0
        %v1045 = vpop.f32.mrf.mxu0
        %v1046 = vpop.f32.mrf.mxu0
        %1047 = vdwg.mxu0
        %v1048 = vadd.f32 %v561, %v564
        %v1049 = vadd.f32 %v562, %v565
        %s1050 = scalar_lea.vmem [#allocation10], 48
        %v1051 = vld [vmem:[%s1050] sm:$0xf]
        %v1052 = vld [vmem:[%s1050 + $0x4] sm:$0xf]
        %v1053 = vld [vmem:[%s1050 + $0x8] sm:$0xf]
        %v1054 = vld [vmem:[%s1050 + $0xc] sm:$0xf]
        %v1055 = vpack.c.bf16 %v1049, %v1048
        %v1056 = vlaneseq
        %v1057 = vshrl.u32 %v1056, 7
        %v1058 = vsub.s32 5, %v1057
        %v1059 = vrot.slane %v550, %v1058
        %v1064 = vunpack.c.l.b16 %v1051
        %v1065 = vunpack.c.l.b16 %v1052
        %v1066 = vunpack.c.l.b16 %v1053
        %v1067 = vunpack.c.l.b16 %v1054
        %v1068 = vpack.c.b16 %v1065, %v1064
        %v1069 = vpack.c.b16 %v1067, %v1066
        %v1073 = vsel %vm584, %v1055, 0
        %1075 = vmatprep.subr.bf16.mxu0 0
        %1076 = vmatpush1.bf16.msra.mxu0 0
        %1077 = vmatprep.subr.bf16.mxu0 0
        %1078 = vmatpush1.bf16.msra.mxu0 0
        %1079 = vmatprep.subr.bf16.mxu0 0
        %1080 = vmatpush1.bf16.msra.mxu0 0
        %1081 = vmatprep.subr.bf16.mxu0 0
        %1082 = vmatpush1.bf16.msra.mxu0 0
        %1083 = vmatprep.subr.bf16.mxu0 0
        %1084 = vmatpush1.bf16.msra.mxu0 0
        %1085 = vmatprep.subr.bf16.mxu0 0
        %1086 = vmatpush1.bf16.msra.mxu0 0
        %1087 = vmatprep.subr.bf16.mxu0 0
        %1088 = vmatpush1.bf16.msra.mxu0 %v1069
        %1089 = vmatprep.subr.bf16.mxu0 0
        %1090 = vmatpush1.bf16.msra.mxu0 %v1068
        %1091 = vmatprep.subr.bf16.mxu0 0
        %1092 = vmatpush2.bf16.msra.mxu0 0
        %1093 = vmatprep.subr.bf16.mxu0 0
        %1094 = vmatpush2.bf16.msra.mxu0 0
        %1095 = vmatprep.subr.bf16.mxu0 0
        %1096 = vmatpush2.bf16.msra.mxu0 0
        %1097 = vmatprep.subr.bf16.mxu0 0
        %1098 = vmatpush2.bf16.msra.mxu0 0
        %1099 = vmatprep.subr.bf16.mxu0 0
        %1100 = vmatpush2.bf16.msra.mxu0 0
        %1101 = vmatprep.subr.bf16.mxu0 0
        %1102 = vmatpush2.bf16.msra.mxu0 0
        %1103 = vmatprep.subr.bf16.mxu0 0
        %1104 = vmatpush2.bf16.msra.mxu0 0
        %1105 = vmatprep.subr.bf16.mxu0 0
        %1106 = vmatpush2.bf16.msra.mxu0 0
        %1107 = vmatprep.mubr.bf16.mxu0 0
        %1108 = vmatmul.mubr.bf16.gmra.mxu0 %v1073
        %v1109 = vpop.f32.mrf.mxu0
        %v1110 = vadd.f32 %v1059, %v1109
        %v1111 = vpop.f32.mrf.mxu0
        %v1112 = vpop.f32.mrf.mxu0
        %v1113 = vadd.f32 %v1059, %v1112
        %v1114 = vpop.f32.mrf.mxu0
        %1115 = vdwg.mxu0
        %s1116 = scalar_lea.vmem [#allocation10], 64
        %v1117 = vld [vmem:[%s1116] sm:$0xf]
        %v1118 = vld [vmem:[%s1116 + $0x4] sm:$0xf]
        %v1119 = vld [vmem:[%s1116 + $0x8] sm:$0xf]
        %v1120 = vld [vmem:[%s1116 + $0xc] sm:$0xf]
        %v1121 = vpack.c.bf16 %v562, %v561
        %v1122 = vlaneseq
        %v1123 = vshrl.u32 %v1122, 7
        %v1124 = vsub.s32 6, %v1123
        %v1125 = vrot.slane %v550, %v1124
        %v1130 = vunpack.c.l.b16 %v1117
        %v1131 = vunpack.c.l.b16 %v1118
        %v1132 = vunpack.c.l.b16 %v1119
        %v1133 = vunpack.c.l.b16 %v1120
        %v1134 = vpack.c.b16 %v1131, %v1130
        %v1135 = vpack.c.b16 %v1133, %v1132
        %v1139 = vsel %vm584, %v1121, 0
        %1141 = vmatprep.subr.bf16.mxu0 0
        %1142 = vmatpush1.bf16.msra.mxu0 0
        %1143 = vmatprep.subr.bf16.mxu0 0
        %1144 = vmatpush1.bf16.msra.mxu0 0
        %1145 = vmatprep.subr.bf16.mxu0 0
        %1146 = vmatpush1.bf16.msra.mxu0 0
        %1147 = vmatprep.subr.bf16.mxu0 0
        %1148 = vmatpush1.bf16.msra.mxu0 0
        %1149 = vmatprep.subr.bf16.mxu0 0
        %1150 = vmatpush1.bf16.msra.mxu0 0
        %1151 = vmatprep.subr.bf16.mxu0 0
        %1152 = vmatpush1.bf16.msra.mxu0 0
        %1153 = vmatprep.subr.bf16.mxu0 0
        %1154 = vmatpush1.bf16.msra.mxu0 %v1135
        %1155 = vmatprep.subr.bf16.mxu0 0
        %1156 = vmatpush1.bf16.msra.mxu0 %v1134
        %1157 = vmatprep.subr.bf16.mxu0 0
        %1158 = vmatpush2.bf16.msra.mxu0 0
        %1159 = vmatprep.subr.bf16.mxu0 0
        %1160 = vmatpush2.bf16.msra.mxu0 0
        %1161 = vmatprep.subr.bf16.mxu0 0
        %1162 = vmatpush2.bf16.msra.mxu0 0
        %1163 = vmatprep.subr.bf16.mxu0 0
        %1164 = vmatpush2.bf16.msra.mxu0 0
        %1165 = vmatprep.subr.bf16.mxu0 0
        %1166 = vmatpush2.bf16.msra.mxu0 0
        %1167 = vmatprep.subr.bf16.mxu0 0
        %1168 = vmatpush2.bf16.msra.mxu0 0
        %1169 = vmatprep.subr.bf16.mxu0 0
        %1170 = vmatpush2.bf16.msra.mxu0 0
        %1171 = vmatprep.subr.bf16.mxu0 0
        %1172 = vmatpush2.bf16.msra.mxu0 0
        %1173 = vmatprep.mubr.bf16.mxu0 0
        %1174 = vmatmul.mubr.bf16.gmra.mxu0 %v1139
        %v1175 = vpop.f32.mrf.mxu0
        %v1176 = vadd.f32 %v1125, %v1175
        %v1177 = vpop.f32.mrf.mxu0
        %v1178 = vpop.f32.mrf.mxu0
        %v1179 = vadd.f32 %v1125, %v1178
        %v1180 = vpop.f32.mrf.mxu0
        %1181 = vdwg.mxu0
        %s1182 = scalar_lea.vmem [#allocation10], 80
        %v1183 = vld [vmem:[%s1182] sm:$0xf]
        %v1184 = vld [vmem:[%s1182 + $0x4] sm:$0xf]
        %v1185 = vld [vmem:[%s1182 + $0x8] sm:$0xf]
        %v1186 = vld [vmem:[%s1182 + $0xc] sm:$0xf]
        %v1187 = vpack.c.bf16 %v1113, %v1110
        %v1188 = vpack.c.bf16 %v1179, %v1176
        %v1189 = vmul.f32 %v1043, %v556
        %v1190 = vmul.f32 %v1043, %v557
        %v1191 = vmul.f32 %v1043, %v558
        %v1192 = vmul.f32 %v1043, %v559
        %v1193 = vpack.c.bf16 %v1190, %v1189
        %v1194 = vpack.c.bf16 %v1192, %v1191
        %v1196 = vsel %vm584, %v1193, 0
        %v1199 = vsel %vm584, %v1194, 0
        %v1202 = vsel %vm584, %v1187, 0
        %1204 = vmatprep.subr.bf16.mxu0 0
        %1205 = vmatpush1.bf16.xpose.msra.mxu0 0
        %1206 = vmatprep.subr.bf16.mxu0 0
        %1207 = vmatpush1.bf16.xpose.msra.mxu0 0
        %1208 = vmatprep.subr.bf16.mxu0 0
        %1209 = vmatpush1.bf16.xpose.msra.mxu0 0
        %1210 = vmatprep.subr.bf16.mxu0 0
        %1211 = vmatpush1.bf16.xpose.msra.mxu0 0
        %1212 = vmatprep.subr.bf16.mxu0 0
        %1213 = vmatpush1.bf16.xpose.msra.mxu0 0
        %1214 = vmatprep.subr.bf16.mxu0 0
        %1215 = vmatpush1.bf16.xpose.msra.mxu0 0
        %1216 = vmatprep.subr.bf16.mxu0 0
        %1217 = vmatpush1.bf16.xpose.msra.mxu0 0
        %1218 = vmatprep.subr.bf16.mxu0 0
        %1219 = vmatpush1.bf16.xpose.msra.mxu0 %v1202
        %1220 = vmatprep.subr.bf16.mxu0 0
        %1221 = vmatpush2.bf16.xpose.msra.mxu0 0
        %1222 = vmatprep.subr.bf16.mxu0 0
        %1223 = vmatpush2.bf16.xpose.msra.mxu0 0
        %1224 = vmatprep.subr.bf16.mxu0 0
        %1225 = vmatpush2.bf16.xpose.msra.mxu0 0
        %1226 = vmatprep.subr.bf16.mxu0 0
        %1227 = vmatpush2.bf16.xpose.msra.mxu0 0
        %1228 = vmatprep.subr.bf16.mxu0 0
        %1229 = vmatpush2.bf16.xpose.msra.mxu0 0
        %1230 = vmatprep.subr.bf16.mxu0 0
        %1231 = vmatpush2.bf16.xpose.msra.mxu0 0
        %1232 = vmatprep.subr.bf16.mxu0 0
        %1233 = vmatpush2.bf16.xpose.msra.mxu0 0
        %1234 = vmatprep.subr.bf16.mxu0 0
        %1235 = vmatpush2.bf16.xpose.msra.mxu0 0
        %1236 = vmatprep.mubr.bf16.mxu0 0
        %1237 = vmatmul.mubr.bf16.gmra.mxu0 %v1196
        %v1238 = vpop.f32.mrf.mxu0
        %v1239 = vadd.f32 0.0, %v1238
        %v1240 = vpop.f32.mrf.mxu0
        %v1241 = vpop.f32.mrf.mxu0
        %v1242 = vadd.f32 0.0, %v1241
        %v1243 = vpop.f32.mrf.mxu0
        %1244 = vmatprep.mubr.bf16.mxu0 0
        %1245 = vmatmul.mubr.bf16.gmra.mxu0 %v1199
        %v1246 = vpop.f32.mrf.mxu0
        %v1247 = vadd.f32 0.0, %v1246
        %v1248 = vpop.f32.mrf.mxu0
        %v1249 = vpop.f32.mrf.mxu0
        %v1250 = vadd.f32 0.0, %v1249
        %v1251 = vpop.f32.mrf.mxu0
        %1252 = vdwg.mxu0
        %vm1253 = vcmask 130048
        %v1254 = vsel %vm1253, %v1239, -inf
        %1255 = vmax.xlane.f32.xlu0 %v1254
        %v1256 = vpop.xlane.xlu0 %1255
        %v1257 = vsel %vm1253, %v1242, -inf
        %1258 = vmax.xlane.f32.xlu0 %v1257
        %v1259 = vpop.xlane.xlu0 %1258
        %v1260 = vsel %vm1253, %v1247, -inf
        %1261 = vmax.xlane.f32.xlu0 %v1260
        %v1262 = vpop.xlane.xlu0 %1261
        %v1263 = vsel %vm1253, %v1250, -inf
        %1264 = vmax.xlane.f32.xlu0 %v1263
        %v1265 = vpop.xlane.xlu0 %1264
        %v1266 = vsub.f32 %v1239, %v1256
        %v1267 = vsub.f32 %v1242, %v1259
        %v1268 = vsub.f32 %v1247, %v1262
        %v1269 = vsub.f32 %v1250, %v1265
        %v1270 = vmul.f32 %v1266, 1.442695
        %v1271 = vpow.pop %v1270
        %v1272 = vmul.f32 %v1267, 1.442695
        %v1273 = vpow.pop %v1272
        %v1274 = vmul.f32 %v1268, 1.442695
        %v1275 = vpow.pop %v1274
        %v1276 = vmul.f32 %v1269, 1.442695
        %v1277 = vpow.pop %v1276
        %v1278 = vsel %vm1253, %v1271, 0.0
        %1279 = vadd.xlane.f32.xlu0 %v1278
        %v1280 = vpop.xlane.xlu0 %1279
        %v1281 = vsel %vm1253, %v1273, 0.0
        %1282 = vadd.xlane.f32.xlu0 %v1281
        %v1283 = vpop.xlane.xlu0 %1282
        %v1284 = vsel %vm1253, %v1275, 0.0
        %1285 = vadd.xlane.f32.xlu0 %v1284
        %v1286 = vpop.xlane.xlu0 %1285
        %v1287 = vsel %vm1253, %v1277, 0.0
        %1288 = vadd.xlane.f32.xlu0 %v1287
        %v1289 = vpop.xlane.xlu0 %1288
        %v1290 = vrcp.pop %v1280
        %v1291 = vrcp.pop %v1283
        %v1292 = vrcp.pop %v1286
        %v1293 = vrcp.pop %v1289
        %v1294 = vmul.f32 %v1271, %v1290
        %v1295 = vmul.f32 %v1273, %v1291
        %v1296 = vmul.f32 %v1275, %v1292
        %v1297 = vmul.f32 %v1277, %v1293
        %v1298 = vpack.c.bf16 %v1295, %v1294
        %v1299 = vpack.c.bf16 %v1297, %v1296
        %v1301 = vsel %vm1253, %v1298, 0
        %v1304 = vsel %vm1253, %v1299, 0
        %1306 = vmatprep.subr.bf16.mxu0 0
        %1307 = vmatpush1.bf16.msra.mxu0 0
        %1308 = vmatprep.subr.bf16.mxu0 0
        %1309 = vmatpush1.bf16.msra.mxu0 0
        %1310 = vmatprep.subr.bf16.mxu0 0
        %1311 = vmatpush1.bf16.msra.mxu0 0
        %1312 = vmatprep.subr.bf16.mxu0 0
        %1313 = vmatpush1.bf16.msra.mxu0 0
        %1314 = vmatprep.subr.bf16.mxu0 0
        %1315 = vmatpush1.bf16.msra.mxu0 0
        %1316 = vmatprep.subr.bf16.mxu0 0
        %1317 = vmatpush1.bf16.msra.mxu0 0
        %1318 = vmatprep.subr.bf16.mxu0 0
        %1319 = vmatpush1.bf16.msra.mxu0 0
        %1320 = vmatprep.subr.bf16.mxu0 0
        %1321 = vmatpush1.bf16.msra.mxu0 %v1188
        %1322 = vmatprep.subr.bf16.mxu0 0
        %1323 = vmatpush2.bf16.msra.mxu0 0
        %1324 = vmatprep.subr.bf16.mxu0 0
        %1325 = vmatpush2.bf16.msra.mxu0 0
        %1326 = vmatprep.subr.bf16.mxu0 0
        %1327 = vmatpush2.bf16.msra.mxu0 0
        %1328 = vmatprep.subr.bf16.mxu0 0
        %1329 = vmatpush2.bf16.msra.mxu0 0
        %1330 = vmatprep.subr.bf16.mxu0 0
        %1331 = vmatpush2.bf16.msra.mxu0 0
        %1332 = vmatprep.subr.bf16.mxu0 0
        %1333 = vmatpush2.bf16.msra.mxu0 0
        %1334 = vmatprep.subr.bf16.mxu0 0
        %1335 = vmatpush2.bf16.msra.mxu0 0
        %1336 = vmatprep.subr.bf16.mxu0 0
        %1337 = vmatpush2.bf16.msra.mxu0 0
        %1338 = vmatprep.mubr.bf16.mxu0 0
        %1339 = vmatmul.mubr.bf16.gmra.mxu0 %v1301
        %v1340 = vpop.f32.mrf.mxu0
        %v1341 = vadd.f32 0.0, %v1340
        %v1342 = vpop.f32.mrf.mxu0
        %v1343 = vpop.f32.mrf.mxu0
        %v1344 = vadd.f32 0.0, %v1343
        %v1345 = vpop.f32.mrf.mxu0
        %1346 = vmatprep.mubr.bf16.mxu0 0
        %1347 = vmatmul.mubr.bf16.gmra.mxu0 %v1304
        %v1348 = vpop.f32.mrf.mxu0
        %v1349 = vadd.f32 0.0, %v1348
        %v1350 = vpop.f32.mrf.mxu0
        %v1351 = vpop.f32.mrf.mxu0
        %v1352 = vadd.f32 0.0, %v1351
        %v1353 = vpop.f32.mrf.mxu0
        %1354 = vdwg.mxu0
        %v1355 = vmul.f32 %v1341, %v552
        %v1356 = vmul.f32 %v1344, %v553
        %v1357 = vmul.f32 %v1349, %v554
        %v1358 = vmul.f32 %v1352, %v555
        %v1359 = vsel %vm584, %v1355, 0.0
        %v1360 = vsel %vm584, %v1356, 0.0
        %v1361 = vadd.f32 %v1359, %v1360
        %v1362 = vsel %vm584, %v1357, 0.0
        %v1363 = vadd.f32 %v1361, %v1362
        %v1364 = vsel %vm584, %v1358, 0.0
        %v1365 = vadd.f32 %v1363, %v1364
        %v1366 = vpack.c.bf16 %v1365, %v1365
        %v1367 = vlaneseq
        %v1368 = vshrl.u32 %v1367, 7
        %v1369 = vsub.s32 7, %v1368
        %v1370 = vrot.slane %v550, %v1369
        %v1375 = vunpack.c.l.b16 %v1183
        %v1376 = vunpack.c.l.b16 %v1184
        %v1377 = vunpack.c.l.b16 %v1185
        %v1378 = vunpack.c.l.b16 %v1186
        %v1379 = vpack.c.b16 %v1376, %v1375
        %v1380 = vpack.c.b16 %v1378, %v1377
        %v1384 = vsel %vm584, %v1366, 0
        %1386 = vmatprep.subr.bf16.mxu0 0
        %1387 = vmatpush1.bf16.msra.mxu0 0
        %1388 = vmatprep.subr.bf16.mxu0 0
        %1389 = vmatpush1.bf16.msra.mxu0 0
        %1390 = vmatprep.subr.bf16.mxu0 0
        %1391 = vmatpush1.bf16.msra.mxu0 0
        %1392 = vmatprep.subr.bf16.mxu0 0
        %1393 = vmatpush1.bf16.msra.mxu0 0
        %1394 = vmatprep.subr.bf16.mxu0 0
        %1395 = vmatpush1.bf16.msra.mxu0 0
        %1396 = vmatprep.subr.bf16.mxu0 0
        %1397 = vmatpush1.bf16.msra.mxu0 0
        %1398 = vmatprep.subr.bf16.mxu0 0
        %1399 = vmatpush1.bf16.msra.mxu0 %v1380
        %1400 = vmatprep.subr.bf16.mxu0 0
        %1401 = vmatpush1.bf16.msra.mxu0 %v1379
        %1402 = vmatprep.subr.bf16.mxu0 0
        %1403 = vmatpush2.bf16.msra.mxu0 0
        %1404 = vmatprep.subr.bf16.mxu0 0
        %1405 = vmatpush2.bf16.msra.mxu0 0
        %1406 = vmatprep.subr.bf16.mxu0 0
        %1407 = vmatpush2.bf16.msra.mxu0 0
        %1408 = vmatprep.subr.bf16.mxu0 0
        %1409 = vmatpush2.bf16.msra.mxu0 0
        %1410 = vmatprep.subr.bf16.mxu0 0
        %1411 = vmatpush2.bf16.msra.mxu0 0
        %1412 = vmatprep.subr.bf16.mxu0 0
        %1413 = vmatpush2.bf16.msra.mxu0 0
        %1414 = vmatprep.subr.bf16.mxu0 0
        %1415 = vmatpush2.bf16.msra.mxu0 0
        %1416 = vmatprep.subr.bf16.mxu0 0
        %1417 = vmatpush2.bf16.msra.mxu0 0
        %1418 = vmatprep.mubr.bf16.mxu0 0
        %1419 = vmatmul.mubr.bf16.gmra.mxu0 %v1384
        %v1420 = vpop.f32.mrf.mxu0
        %v1421 = vadd.f32 %v1370, %v1420
        %v1422 = vpop.f32.mrf.mxu0
        %v1423 = vpop.f32.mrf.mxu0
        %v1424 = vpop.f32.mrf.mxu0
        %1425 = vdwg.mxu0
        %v1426 = vadd.f32 %v981, %v1421
        %v1427 = vsel %vm584, %v1426, 0.0
        %1428 = vadd.xlane.f32.xlu0 %v1427
        %v1429 = vpop.xlane.xlu0 %1428
        %v1430 = vmul.f32 %v1429, %v961
        %v1431 = vsub.f32 %v1426, %v1430
        %v1432 = vmul.f32 %v1431, %v1431
        %v1433 = vsel %vm584, %v1432, 0.0
        %1434 = vadd.xlane.f32.xlu0 %v1433
        %v1435 = vpop.xlane.xlu0 %1434
        %v1436 = vmul.f32 %v1435, %v961
        %v1437 = vadd.f32 %v1436, 1e-05
        %v1438 = vrsqrt.pop %v1437
        %v1439 = vmul.f32 %v1431, %v1438
        %v1440 = vlaneseq
        %v1441 = vshrl.u32 %v1440, 7
        %v1442 = vsub.s32 3, %v1441
        %v1443 = vrot.slane %v551, %v1442
        %v1444 = vmul.f32 %v1439, %v1443
        %v1445 = vlaneseq
        %v1446 = vshrl.u32 %v1445, 7
        %v1447 = vsub.s32 4, %v1446
        %v1448 = vrot.slane %v551, %v1447
        %v1449 = vadd.f32 %v1444, %v1448
        %v1450 = vld [vmem:[#allocation11] sm:$0xf]
        %v1451 = vld [vmem:[#allocation11 + $0x4] sm:$0xf]
        %v1452 = vld [vmem:[#allocation11 + $0x8] sm:$0xf]
        %v1453 = vld [vmem:[#allocation11 + $0xc] sm:$0xf]
        %v1454 = vpack.c.bf16 %v1449, %v1449
        %v1455 = vld [vmem:[#allocation13] sm:$0x1]
        %v1457 = vlaneseq
        %v1458 = vshrl.u32 %v1457, 7
        %v1459 = vsub.s32 0, %v1458
        %v1460 = vrot.slane %v1455, %v1459
        %v1466 = vunpack.c.l.b16 %v1450
        %v1467 = vunpack.c.l.b16 %v1451
        %v1468 = vunpack.c.l.b16 %v1452
        %v1469 = vunpack.c.l.b16 %v1453
        %v1470 = vpack.c.b16 %v1467, %v1466
        %v1471 = vpack.c.b16 %v1469, %v1468
        %v1475 = vsel %vm584, %v1454, 0
        %1477 = vmatprep.subr.bf16.mxu0 0
        %1478 = vmatpush1.bf16.msra.mxu0 0
        %1479 = vmatprep.subr.bf16.mxu0 0
        %1480 = vmatpush1.bf16.msra.mxu0 0
        %1481 = vmatprep.subr.bf16.mxu0 0
        %1482 = vmatpush1.bf16.msra.mxu0 0
        %1483 = vmatprep.subr.bf16.mxu0 0
        %1484 = vmatpush1.bf16.msra.mxu0 0
        %1485 = vmatprep.subr.bf16.mxu0 0
        %1486 = vmatpush1.bf16.msra.mxu0 0
        %1487 = vmatprep.subr.bf16.mxu0 0
        %1488 = vmatpush1.bf16.msra.mxu0 0
        %1489 = vmatprep.subr.bf16.mxu0 0
        %1490 = vmatpush1.bf16.msra.mxu0 %v1471
        %1491 = vmatprep.subr.bf16.mxu0 0
        %1492 = vmatpush1.bf16.msra.mxu0 %v1470
        %1493 = vmatprep.subr.bf16.mxu0 0
        %1494 = vmatpush2.bf16.msra.mxu0 0
        %1495 = vmatprep.subr.bf16.mxu0 0
        %1496 = vmatpush2.bf16.msra.mxu0 0
        %1497 = vmatprep.subr.bf16.mxu0 0
        %1498 = vmatpush2.bf16.msra.mxu0 0
        %1499 = vmatprep.subr.bf16.mxu0 0
        %1500 = vmatpush2.bf16.msra.mxu0 0
        %1501 = vmatprep.subr.bf16.mxu0 0
        %1502 = vmatpush2.bf16.msra.mxu0 0
        %1503 = vmatprep.subr.bf16.mxu0 0
        %1504 = vmatpush2.bf16.msra.mxu0 0
        %1505 = vmatprep.subr.bf16.mxu0 0
        %1506 = vmatpush2.bf16.msra.mxu0 0
        %1507 = vmatprep.subr.bf16.mxu0 0
        %1508 = vmatpush2.bf16.msra.mxu0 0
        %1509 = vmatprep.mubr.bf16.mxu0 0
        %1510 = vmatmul.mubr.bf16.gmra.mxu0 %v1475
        %v1511 = vpop.f32.mrf.mxu0
        %v1512 = vadd.f32 %v1460, %v1511
        %v1513 = vpop.f32.mrf.mxu0
        %v1514 = vpop.f32.mrf.mxu0
        %v1515 = vpop.f32.mrf.mxu0
        %1516 = vdwg.mxu0
        %v1517 = vmax.f32 %v1512, 0.0
        %v1518 = vld [vmem:[%s8] sm:$0xf]
        %v1519 = vld [vmem:[%s8 + $0x4] sm:$0xf]
        %v1520 = vld [vmem:[%s8 + $0x8] sm:$0xf]
        %v1521 = vld [vmem:[%s8 + $0xc] sm:$0xf]
        %v1522 = vld [vmem:[%s8 + $0x10] sm:$0xf]
        %v1523 = vld [vmem:[%s8 + $0x14] sm:$0xf]
        %v1524 = vld [vmem:[%s8 + $0x18] sm:$0xf]
        %v1525 = vld [vmem:[%s8 + $0x1c] sm:$0xf]
        %v1526 = vpack.c.bf16 %v1517, %v1517
        %v1527 = vlaneseq
        %v1528 = vshrl.u32 %v1527, 7
        %v1529 = vsub.s32 0, %v1528
        %v1530 = vrot.slane %v551, %v1529
        %v1539 = vunpack.c.l.b16 %v1518
        %v1540 = vunpack.c.l.b16 %v1519
        %v1541 = vunpack.c.l.b16 %v1520
        %v1542 = vunpack.c.l.b16 %v1521
        %v1543 = vunpack.c.l.b16 %v1522
        %v1544 = vunpack.c.l.b16 %v1523
        %v1545 = vunpack.c.l.b16 %v1524
        %v1546 = vunpack.c.l.b16 %v1525
        %v1547 = vpack.c.b16 %v1540, %v1539
        %v1548 = vpack.c.b16 %v1542, %v1541
        %v1549 = vpack.c.b16 %v1544, %v1543
        %v1550 = vpack.c.b16 %v1546, %v1545
        %vm1555 = vcmask 523264
        %v1557 = vsel %vm1555, %v1526, 0
        %1559 = vmatprep.subr.bf16.mxu0 0
        %1560 = vmatpush1.bf16.msra.mxu0 0
        %1561 = vmatprep.subr.bf16.mxu0 0
        %1562 = vmatpush1.bf16.msra.mxu0 0
        %1563 = vmatprep.subr.bf16.mxu0 0
        %1564 = vmatpush1.bf16.msra.mxu0 0
        %1565 = vmatprep.subr.bf16.mxu0 0
        %1566 = vmatpush1.bf16.msra.mxu0 0
        %1567 = vmatprep.subr.bf16.mxu0 0
        %1568 = vmatpush1.bf16.msra.mxu0 %v1550
        %1569 = vmatprep.subr.bf16.mxu0 0
        %1570 = vmatpush1.bf16.msra.mxu0 %v1549
        %1571 = vmatprep.subr.bf16.mxu0 0
        %1572 = vmatpush1.bf16.msra.mxu0 %v1548
        %1573 = vmatprep.subr.bf16.mxu0 0
        %1574 = vmatpush1.bf16.msra.mxu0 %v1547
        %1575 = vmatprep.subr.bf16.mxu0 0
        %1576 = vmatpush2.bf16.msra.mxu0 0
        %1577 = vmatprep.subr.bf16.mxu0 0
        %1578 = vmatpush2.bf16.msra.mxu0 0
        %1579 = vmatprep.subr.bf16.mxu0 0
        %1580 = vmatpush2.bf16.msra.mxu0 0
        %1581 = vmatprep.subr.bf16.mxu0 0
        %1582 = vmatpush2.bf16.msra.mxu0 0
        %1583 = vmatprep.subr.bf16.mxu0 0
        %1584 = vmatpush2.bf16.msra.mxu0 0
        %1585 = vmatprep.subr.bf16.mxu0 0
        %1586 = vmatpush2.bf16.msra.mxu0 0
        %1587 = vmatprep.subr.bf16.mxu0 0
        %1588 = vmatpush2.bf16.msra.mxu0 0
        %1589 = vmatprep.subr.bf16.mxu0 0
        %1590 = vmatpush2.bf16.msra.mxu0 0
        %1591 = vmatprep.mubr.bf16.mxu0 0
        %1592 = vmatmul.mubr.bf16.gmra.mxu0 %v1557
        %v1593 = vpop.f32.mrf.mxu0
        %v1594 = vadd.f32 %v1530, %v1593
        %v1595 = vpop.f32.mrf.mxu0
        %v1596 = vpop.f32.mrf.mxu0
        %v1597 = vpop.f32.mrf.mxu0
        %1598 = vdwg.mxu0
        %v1599 = vadd.f32 %v1449, %v1594
        %v1600 = vsel %vm584, %v1599, 0.0
        %1601 = vadd.xlane.f32.xlu0 %v1600
        %v1602 = vpop.xlane.xlu0 %1601
        %v1603 = vmul.f32 %v1602, %v961
        %v1604 = vsub.f32 %v1599, %v1603
        %v1605 = vmul.f32 %v1604, %v1604
        %v1606 = vsel %vm584, %v1605, 0.0
        %1607 = vadd.xlane.f32.xlu0 %v1606
        %v1608 = vpop.xlane.xlu0 %1607
        %v1609 = vmul.f32 %v1608, %v961
        %v1610 = vadd.f32 %v1609, 1e-05
        %v1611 = vrsqrt.pop %v1610
        %v1612 = vmul.f32 %v1604, %v1611
        %v1613 = vlaneseq
        %v1614 = vshrl.u32 %v1613, 7
        %v1615 = vsub.s32 5, %v1614
        %v1616 = vrot.slane %v551, %v1615
        %v1617 = vmul.f32 %v1612, %v1616
        %v1618 = vlaneseq
        %v1619 = vshrl.u32 %v1618, 7
        %v1620 = vsub.s32 6, %v1619
        %v1621 = vrot.slane %v551, %v1620
        %v1622 = vadd.f32 %v1617, %v1621
        %v1624 = vrot.slane %v1622, 2
        %1625 = vrot.lane.b32.xlu0 %v1624, 32
        %v1626 = vpop.permute.xlu0 %1625
        %v1628 = vrot.slane %v1622, 4
        %1629 = vrot.lane.b32.xlu0 %v1628, 64
        %v1630 = vpop.permute.xlu0 %1629
        %v1632 = vrot.slane %v1622, 6
        %1633 = vrot.lane.b32.xlu0 %v1632, 96
        %v1634 = vpop.permute.xlu0 %1633
        %v1636 = vsel %vm584, %v1622, %v1626
        %v1637 = vsel %vm1555, %v1636, %v1630
        %vm1638 = vcmask 785408
        %v1639 = vsel %vm1638, %v1637, %v1634
        %1640 = vst [vmem:[%s539] sm:$0x3] %v1639
        %s1641 = sand.u32 %s292, 1
        %s1642 = scalar_lea.sflag [#allocation4], %s1641
        %s1643 = sand.u32 %s292, 1
        %s1644 = smul.addr %s1643, 2
        %s1645 = scalar_lea.vmem [#allocation14], %s1644
        // Predicated region
        $region93: #{tpu_custom_call.1} parent=63 // pred_check
          %p1646 = pneg %p302
        $region94: #{tpu_custom_call.1} parent=63 // pred_check_branch
          %1648 = sbr.rel (%p1646) target = $region96
        $region95: #{tpu_custom_call.1} parent=63 // pred_region
          %s1650 = ssub.s32 32, 32
          %1651 = vsyncadd %s1642, %s1650
          %s1652 = smul.addr %s33, 32
          %s1653 = scalar_lea.hbm %s11, %s1652
          %s1655 = sshll.u32 %s1645, 4
          %s1656 = int_to_ptr.vmem [resolvable:$true] %s1655
          %1658 = dma.vmem_to_hbm [thread:$0]  %s1656, 32, %s1653, %s1642
        $region96: #{tpu_custom_call.1} parent=63 // pred_fallthru
          _
      $region64: #{tpu_custom_call.1} parent=5 // pred_fallthru
        _
      %p1659 = scmp.le.s32.totalorder 2, %s28
      // Predicated region
      $region97: #{tpu_custom_call.1} parent=5 // pred_check
        %p1660 = pneg %p1659
      $region98: #{tpu_custom_call.1} parent=5 // pred_check_branch
        %1662 = sbr.rel (%p1660) target = $region100
      $region99: #{tpu_custom_call.1} parent=5 // pred_region
        %s1663 = ssub.s32 %s28, 2
        // Predicated region
        $region101: #{tpu_custom_call.1} parent=99 // pred_check
          %p1664 = pneg %p308
        $region102: #{tpu_custom_call.1} parent=99 // pred_check_branch
          %1666 = sbr.rel (%p1664) target = $region104
        $region103: #{tpu_custom_call.1} parent=99 // pred_region
          %s1667 = sand.u32 %s293, 1
          %s1668 = scalar_lea.sflag [#allocation4], %s1667
          %s1669 = sand.u32 %s293, 1
          %s1670 = smul.addr %s1669, 2
          %s1671 = scalar_lea.vmem [#allocation14], %s1670
          %1672 = dma.done %s1668, 32
        $region104: #{tpu_custom_call.1} parent=99 // pred_fallthru
          _
      $region100: #{tpu_custom_call.1} parent=5 // pred_fallthru
        _
    $region6: #{tpu_custom_call.1} parent=1 // loop_footer
      %s32 = sadd.s32 1, %s28
    $region7: #{tpu_custom_call.1} parent=1 // loop_footer_branch
      %27 = sbr.rel target = $region3
    $region8: #{tpu_custom_call.1} parent=1 // loop_exit
      _
    %1673 = vsyncpa [#allocation3], 1
    %s1674 = scalar_lea.sflag [#allocation3], 1
    %1675 = vsyncpa %s1674, 1
    %1676 = vsyncpa [#allocation6], 1
    %s1677 = scalar_lea.sflag [#allocation6], 1
    %1678 = vsyncpa %s1677, 1
    %1679 = vsyncpa [#allocation9], 1
    %1680 = vsyncpa [#allocation12], 1
    %1681 = vsyncpa [#allocation4], 1
    %s1682 = scalar_lea.sflag [#allocation4], 1
    %1683 = vsyncpa %s1682, 1

</llo_original>
